<compile_context>
chip_gen: v7x
topology: tpu7x:2x2x1
jax: 0.10.0
libtpu: 0.0.40
codegen_flags: <defaults>
</compile_context>

<pallas_src>
import functools

import jax
import jax.numpy as jnp
from jax import lax
from jax.experimental import pallas as pl
from jax.experimental.pallas import tpu as pltpu


def get_outnorm(shape, out_norm: str = "") -> float:
    """Loss normalization (same semantics as the PyTorch helper)."""
    if not out_norm:
        return 1.0
    norm = 1.0
    if "b" in out_norm:
        norm /= shape[0]
    if "c" in out_norm:
        norm /= shape[-3]
    if "i" in out_norm:
        norm /= shape[-1] * shape[-2]
    return norm


def _ofr_kernel(H, W,
                x0_ref, x1_ref, flowf_ref, flow4_ref,      # inputs
                l1_out_ref, tv_out_ref,                    # outputs (SMEM scalars)
                acc_l1, acc_dx, acc_dy):                   # VMEM accumulators
    """Per-batch step: bilinear warp + |x1 - warped| and TV(L1) of the flow."""
    b = pl.program_id(0)
    nb = pl.num_programs(0)
    HW = H * W

    @pl.when(b == 0)
    def _():
        acc_l1[...] = jnp.zeros_like(acc_l1)
        acc_dx[...] = jnp.zeros_like(acc_dx)
        acc_dy[...] = jnp.zeros_like(acc_dy)

    # ---------------- bilinear warp of x0 by the optical flow ----------------
    fl = flowf_ref[0].astype(jnp.float32)            # (2, HW)
    fx = fl[0:1, :]                                  # (1, HW) flow along x (pixels)
    fy = fl[1:2, :]                                  # (1, HW) flow along y (pixels)

    # Base pixel coordinates of every output pixel (row-major flattening),
    # computed in f32 to avoid integer div/rem on the VPU.
    i_f = lax.broadcasted_iota(jnp.int32, (1, HW), 1).astype(jnp.float32)
    base_y = jnp.floor((i_f + 0.5) / W)
    base_x = i_f - base_y * W

    sx = base_x + fx
    sy = base_y + fy
    x0f = jnp.floor(sx)
    y0f = jnp.floor(sy)
    wx = sx - x0f
    wy = sy - y0f
    # Border padding: clamp corner indices (weights keep their unclamped values).
    x0c = jnp.clip(x0f, 0.0, W - 1)
    x1c = jnp.clip(x0f + 1.0, 0.0, W - 1)
    y0c = jnp.clip(y0f, 0.0, H - 1)
    y1c = jnp.clip(y0f + 1.0, 0.0, H - 1)

    idx00 = (y0c * W + x0c).astype(jnp.int32)        # (1, HW) flat source indices
    idx01 = (y0c * W + x1c).astype(jnp.int32)
    idx10 = (y1c * W + x0c).astype(jnp.int32)
    idx11 = (y1c * W + x1c).astype(jnp.int32)

    w00 = (1.0 - wx) * (1.0 - wy)
    w01 = wx * (1.0 - wy)
    w10 = (1.0 - wx) * wy
    w11 = wx * wy

    # One-hot bilinear weight matrix G[i, j] = weight of source pixel i for
    # output pixel j.  Gather-free: the warp becomes an MXU matmul.
    iota_in = lax.broadcasted_iota(jnp.int32, (HW, HW), 0)
    gmat = (jnp.where(iota_in == idx00, w00, 0.0)
            + jnp.where(iota_in == idx01, w01, 0.0)
            + jnp.where(iota_in == idx10, w10, 0.0)
            + jnp.where(iota_in == idx11, w11, 0.0))          # (HW_in, HW_out) f32

    x0v = x0_ref[0].astype(jnp.float32)              # (C, HW)
    warped = jnp.dot(x0v, gmat,
                     precision=lax.Precision.HIGHEST,
                     preferred_element_type=jnp.float32)      # (C, HW)

    x1v = x1_ref[0].astype(jnp.float32)              # (C, HW)
    acc_l1[...] += jnp.abs(x1v - warped)             # vector accumulate (VPU only)

    # ---------------- TV(L1) regularizer on the flow ----------------
    f4 = flow4_ref[0].astype(jnp.float32)            # (2, H, W)
    acc_dx[...] += jnp.abs(f4[:, :, 1:] - f4[:, :, :-1])      # (2, H, W-1)
    acc_dy[...] += jnp.abs(f4[:, 1:, :] - f4[:, :-1, :])      # (2, H-1, W)

    # Single cross-lane reduce + scalar write, only once.
    @pl.when(b == nb - 1)
    def _():
        l1_out_ref[0, 0] = jnp.sum(acc_l1[...])
        tv_out_ref[0, 0] = jnp.sum(acc_dx[...]) + jnp.sum(acc_dy[...])


def ofr_loss(x0, x1, optical_flow, reg_weight=0.1):
    """Optical flow reconstruction loss (forward of the PyTorch OFR_loss)."""
    B, C, H, W = x0.shape
    assert x1.shape == (B, C, H, W)
    assert optical_flow.shape == (B, 2, H, W)
    HW = H * W

    # Layout plumbing only (reshapes, no padding / extra passes over HBM).
    x0r = x0.reshape(B, C, HW)
    x1r = x1.reshape(B, C, HW)
    flowf = optical_flow.reshape(B, 2, HW)

    kernel = functools.partial(_ofr_kernel, H, W)   # Python ints -> literals

    itemsize = x0.dtype.itemsize
    cost = pl.CostEstimate(
        flops=int(B * (2 * C * HW * HW + 12 * HW * HW + 40 * HW)),
        transcendentals=0,
        bytes_accessed=int((x0.size + x1.size + 2 * optical_flow.size) * itemsize + 8),
    )

    l1_sum, tv_sum = pl.pallas_call(
        kernel,
        out_shape=(jax.ShapeDtypeStruct((1, 1), jnp.float32),
                   jax.ShapeDtypeStruct((1, 1), jnp.float32)),
        grid_spec=pltpu.PrefetchScalarGridSpec(
            num_scalar_prefetch=0,
            grid=(B,),
            in_specs=[
                pl.BlockSpec((1, C, HW), lambda b: (b, 0, 0)),       # x0
                pl.BlockSpec((1, C, HW), lambda b: (b, 0, 0)),       # x1
                pl.BlockSpec((1, 2, HW), lambda b: (b, 0, 0)),       # flow (flat)
                pl.BlockSpec((1, 2, H, W), lambda b: (b, 0, 0, 0)),  # flow (2D, for TV)
            ],
            out_specs=(
                pl.BlockSpec((1, 1), lambda b: (0, 0),
                             memory_space=pltpu.MemorySpace.SMEM),
                pl.BlockSpec((1, 1), lambda b: (0, 0),
                             memory_space=pltpu.MemorySpace.SMEM),
            ),
            scratch_shapes=[
                pltpu.VMEM((C, HW), jnp.float32),       # |x1 - warped| accumulator
                pltpu.VMEM((2, H, W - 1), jnp.float32),  # |dx| accumulator
                pltpu.VMEM((2, H - 1, W), jnp.float32),  # |dy| accumulator
            ],
        ),
        compiler_params=pltpu.CompilerParams(
            dimension_semantics=("arbitrary",)),   # batch axis carries accumulators
        cost_estimate=cost,
    )(x0r, x1r, flowf, optical_flow)

    l1_mean = l1_sum[0, 0] / (B * C * H * W)
    reg = tv_sum[0, 0] * get_outnorm(optical_flow.shape, "bi")   # TVLoss(sum,'bi')
    return l1_mean + jnp.float32(reg_weight) * reg


# ----------------------------- pure-JAX reference -----------------------------
def _warp_ref(x0, flow):
    B, C, H, W = x0.shape
    yy, xx = jnp.meshgrid(jnp.arange(H, dtype=jnp.float32),
                          jnp.arange(W, dtype=jnp.float32), indexing="ij")
    sx = xx[None] + flow[:, 0]
    sy = yy[None] + flow[:, 1]
    x0f = jnp.floor(sx); y0f = jnp.floor(sy)
    wx = (sx - x0f)[:, None]; wy = (sy - y0f)[:, None]
    x0i = jnp.clip(x0f, 0, W - 1).astype(jnp.int32)
    x1i = jnp.clip(x0f + 1, 0, W - 1).astype(jnp.int32)
    y0i = jnp.clip(y0f, 0, H - 1).astype(jnp.int32)
    y1i = jnp.clip(y0f + 1, 0, H - 1).astype(jnp.int32)
    xflat = x0.reshape(B, C, H * W)

    def gather(yi, xi):
        idx = (yi * W + xi).reshape(B, 1, H * W)
        return jnp.take_along_axis(xflat, idx, axis=2).reshape(B, C, H, W)

    return (gather(y0i, x0i) * (1 - wx) * (1 - wy)
            + gather(y0i, x1i) * wx * (1 - wy)
            + gather(y1i, x0i) * (1 - wx) * wy
            + gather(y1i, x1i) * wx * wy)


def _ofr_loss_ref(x0, x1, flow, reg_weight=0.1):
    warped = _warp_ref(x0, flow)
    l1 = jnp.mean(jnp.abs(x1 - warped))
    dx = flow[:, :, :, 1:] - flow[:, :, :, :-1]
    dy = flow[:, :, 1:, :] - flow[:, :, :-1, :]
    tv = (jnp.sum(jnp.abs(dx)) + jnp.sum(jnp.abs(dy))) * get_outnorm(flow.shape, "bi")
    return l1 + reg_weight * tv


if __name__ == "__main__":
    key = jax.random.PRNGKey(0)
    k0, k1, kf = jax.random.split(key, 3)
    B, C, H, W = 2, 3, 16, 16                       # small video-frame shapes
    x0 = jax.random.normal(k0, (B, C, H, W), dtype=jnp.float32)
    x1 = jax.random.normal(k1, (B, C, H, W), dtype=jnp.float32)
    flow = jax.random.normal(kf, (B, 2, H, W), dtype=jnp.float32)

    loss = jax.block_until_ready(jax.jit(ofr_loss)(x0, x1, flow))
    ref = jax.block_until_ready(_ofr_loss_ref(x0, x1, flow))

    assert jnp.allclose(loss, ref, rtol=1e-3, atol=1e-4), (float(loss), float(ref))
    print("KERNEL_OK")
</pallas_src>

<mosaic_0001>
module attributes {stable_mosaic.version = 11 : i64} {
  func.func @_ofr_kernel(%arg0: i32, %arg1: memref<1x3x256xf32, #tpu.memory_space<vmem>>, %arg2: memref<1x3x256xf32, #tpu.memory_space<vmem>>, %arg3: memref<1x2x256xf32, #tpu.memory_space<vmem>>, %arg4: memref<1x2x16x16xf32, #tpu.memory_space<vmem>>, %arg5: memref<1x1xf32, #tpu.memory_space<smem>>, %arg6: memref<1x1xf32, #tpu.memory_space<smem>>, %arg7: memref<3x256xf32, #tpu.memory_space<vmem>>, %arg8: memref<2x16x15xf32, #tpu.memory_space<vmem>>, %arg9: memref<2x15x16xf32, #tpu.memory_space<vmem>>) attributes {dimension_semantics = [#tpu.dimension_semantics<arbitrary>], iteration_bounds = array<i64: 2>, scalar_prefetch = 0 : i64, scratch_operands = 3 : i64, tpu.core_type = #tpu.core_type<tc>, window_params = [{transform_indices = @transform_0, window_bounds = array<i64: 1, 3, 256>}, {transform_indices = @transform_1, window_bounds = array<i64: 1, 3, 256>}, {transform_indices = @transform_2, window_bounds = array<i64: 1, 2, 256>}, {transform_indices = @transform_3, window_bounds = array<i64: 1, 2, 16, 16>}, {transform_indices = @transform_4, window_bounds = array<i64: 1, 1>}, {transform_indices = @transform_5, window_bounds = array<i64: 1, 1>}]} {
    %c0_i32 = arith.constant 0 : i32
    %0 = arith.cmpi eq, %arg0, %c0_i32 : i32
    %1 = arith.extui %0 : i1 to i32
    %c0_i32_0 = arith.constant 0 : i32
    %2 = arith.cmpi ne, %1, %c0_i32_0 : i32
    scf.if %2 {
      %cst_54 = arith.constant 0.000000e+00 : f32
      %132 = vector.broadcast %cst_54 : f32 to vector<3x256xf32>
      %c0_55 = arith.constant 0 : index
      %c0_56 = arith.constant 0 : index
      %133 = vector.load %arg7[%c0_55, %c0_56] : memref<3x256xf32, #tpu.memory_space<vmem>>, vector<3x256xf32>
      tpu.vector_store %arg7[%c0_55, %c0_56], %132 {strides = array<i32>} : memref<3x256xf32, #tpu.memory_space<vmem>>, vector<3x256xf32>,
      %cst_57 = arith.constant 0.000000e+00 : f32
      %134 = vector.broadcast %cst_57 : f32 to vector<2x16x15xf32>
      %c0_58 = arith.constant 0 : index
      %c0_59 = arith.constant 0 : index
      %c0_60 = arith.constant 0 : index
      %135 = vector.load %arg8[%c0_58, %c0_59, %c0_60] : memref<2x16x15xf32, #tpu.memory_space<vmem>>, vector<2x16x15xf32>
      tpu.vector_store %arg8[%c0_58, %c0_59, %c0_60], %134 {strides = array<i32>} : memref<2x16x15xf32, #tpu.memory_space<vmem>>, vector<2x16x15xf32>,
      %cst_61 = arith.constant 0.000000e+00 : f32
      %136 = vector.broadcast %cst_61 : f32 to vector<2x15x16xf32>
      %c0_62 = arith.constant 0 : index
      %c0_63 = arith.constant 0 : index
      %c0_64 = arith.constant 0 : index
      %137 = vector.load %arg9[%c0_62, %c0_63, %c0_64] : memref<2x15x16xf32, #tpu.memory_space<vmem>>, vector<2x15x16xf32>
      tpu.vector_store %arg9[%c0_62, %c0_63, %c0_64], %136 {strides = array<i32>} : memref<2x15x16xf32, #tpu.memory_space<vmem>>, vector<2x15x16xf32>,
    } else {
    }
    %c0 = arith.constant 0 : index
    %c0_1 = arith.constant 0 : index
    %c0_2 = arith.constant 0 : index
    %3 = vector.load %arg3[%c0, %c0_1, %c0_2] : memref<1x2x256xf32, #tpu.memory_space<vmem>>, vector<1x2x256xf32>
    %4 = vector.shape_cast %3 : vector<1x2x256xf32> to vector<2x256xf32>
    %5 = vector.extract_strided_slice %4 {offsets = [0, 0], sizes = [1, 256], strides = [1, 1]} : vector<2x256xf32> to vector<1x256xf32>
    %6 = vector.extract_strided_slice %4 {offsets = [1, 0], sizes = [1, 256], strides = [1, 1]} : vector<2x256xf32> to vector<1x256xf32>
    %7 = tpu.iota {dimensions = array<i32: 1>} : vector<1x256xi32>
    %8 = arith.sitofp %7 : vector<1x256xi32> to vector<1x256xf32>
    %cst = arith.constant 5.000000e-01 : f32
    %9 = vector.broadcast %cst : f32 to vector<1x256xf32>
    %10 = arith.addf %8, %9 : vector<1x256xf32>
    %cst_3 = arith.constant 1.600000e+01 : f32
    %11 = vector.broadcast %cst_3 : f32 to vector<1x256xf32>
    %12 = arith.divf %10, %11 : vector<1x256xf32>
    %13 = math.floor %12 : vector<1x256xf32>
    %cst_4 = arith.constant 1.600000e+01 : f32
    %14 = vector.broadcast %cst_4 : f32 to vector<1x256xf32>
    %15 = arith.mulf %13, %14 : vector<1x256xf32>
    %16 = arith.subf %8, %15 : vector<1x256xf32>
    %17 = arith.addf %16, %5 : vector<1x256xf32>
    %18 = arith.addf %13, %6 : vector<1x256xf32>
    %19 = math.floor %17 : vector<1x256xf32>
    %20 = math.floor %18 : vector<1x256xf32>
    %21 = arith.subf %17, %19 : vector<1x256xf32>
    %22 = arith.subf %18, %20 : vector<1x256xf32>
    %cst_5 = arith.constant 0.000000e+00 : f32
    %c15_i32 = arith.constant 15 : i32
    %23 = vector.broadcast %cst_5 : f32 to vector<1x256xf32>
    %24 = arith.maximumf %23, %19 : vector<1x256xf32>
    %25 = arith.sitofp %c15_i32 : i32 to f32
    %26 = vector.broadcast %25 : f32 to vector<1x256xf32>
    %27 = arith.minimumf %26, %24 : vector<1x256xf32>
    %cst_6 = arith.constant 1.000000e+00 : f32
    %28 = vector.broadcast %cst_6 : f32 to vector<1x256xf32>
    %29 = arith.addf %19, %28 : vector<1x256xf32>
    %cst_7 = arith.constant 0.000000e+00 : f32
    %c15_i32_8 = arith.constant 15 : i32
    %30 = vector.broadcast %cst_7 : f32 to vector<1x256xf32>
    %31 = arith.maximumf %30, %29 : vector<1x256xf32>
    %32 = arith.sitofp %c15_i32_8 : i32 to f32
    %33 = vector.broadcast %32 : f32 to vector<1x256xf32>
    %34 = arith.minimumf %33, %31 : vector<1x256xf32>
    %cst_9 = arith.constant 0.000000e+00 : f32
    %c15_i32_10 = arith.constant 15 : i32
    %35 = vector.broadcast %cst_9 : f32 to vector<1x256xf32>
    %36 = arith.maximumf %35, %20 : vector<1x256xf32>
    %37 = arith.sitofp %c15_i32_10 : i32 to f32
    %38 = vector.broadcast %37 : f32 to vector<1x256xf32>
    %39 = arith.minimumf %38, %36 : vector<1x256xf32>
    %cst_11 = arith.constant 1.000000e+00 : f32
    %40 = vector.broadcast %cst_11 : f32 to vector<1x256xf32>
    %41 = arith.addf %20, %40 : vector<1x256xf32>
    %cst_12 = arith.constant 0.000000e+00 : f32
    %c15_i32_13 = arith.constant 15 : i32
    %42 = vector.broadcast %cst_12 : f32 to vector<1x256xf32>
    %43 = arith.maximumf %42, %41 : vector<1x256xf32>
    %44 = arith.sitofp %c15_i32_13 : i32 to f32
    %45 = vector.broadcast %44 : f32 to vector<1x256xf32>
    %46 = arith.minimumf %45, %43 : vector<1x256xf32>
    %cst_14 = arith.constant 1.600000e+01 : f32
    %47 = vector.broadcast %cst_14 : f32 to vector<1x256xf32>
    %48 = arith.mulf %39, %47 : vector<1x256xf32>
    %49 = arith.addf %48, %27 : vector<1x256xf32>
    %50 = arith.fptosi %49 : vector<1x256xf32> to vector<1x256xi32>
    %cst_15 = arith.constant 1.600000e+01 : f32
    %51 = vector.broadcast %cst_15 : f32 to vector<1x256xf32>
    %52 = arith.mulf %39, %51 : vector<1x256xf32>
    %53 = arith.addf %52, %34 : vector<1x256xf32>
    %54 = arith.fptosi %53 : vector<1x256xf32> to vector<1x256xi32>
    %cst_16 = arith.constant 1.600000e+01 : f32
    %55 = vector.broadcast %cst_16 : f32 to vector<1x256xf32>
    %56 = arith.mulf %46, %55 : vector<1x256xf32>
    %57 = arith.addf %56, %27 : vector<1x256xf32>
    %58 = arith.fptosi %57 : vector<1x256xf32> to vector<1x256xi32>
    %cst_17 = arith.constant 1.600000e+01 : f32
    %59 = vector.broadcast %cst_17 : f32 to vector<1x256xf32>
    %60 = arith.mulf %46, %59 : vector<1x256xf32>
    %61 = arith.addf %60, %34 : vector<1x256xf32>
    %62 = arith.fptosi %61 : vector<1x256xf32> to vector<1x256xi32>
    %cst_18 = arith.constant 1.000000e+00 : f32
    %63 = vector.broadcast %cst_18 : f32 to vector<1x256xf32>
    %64 = arith.subf %63, %21 : vector<1x256xf32>
    %cst_19 = arith.constant 1.000000e+00 : f32
    %65 = vector.broadcast %cst_19 : f32 to vector<1x256xf32>
    %66 = arith.subf %65, %22 : vector<1x256xf32>
    %67 = arith.mulf %64, %66 : vector<1x256xf32>
    %cst_20 = arith.constant 1.000000e+00 : f32
    %68 = vector.broadcast %cst_20 : f32 to vector<1x256xf32>
    %69 = arith.subf %68, %22 : vector<1x256xf32>
    %70 = arith.mulf %21, %69 : vector<1x256xf32>
    %cst_21 = arith.constant 1.000000e+00 : f32
    %71 = vector.broadcast %cst_21 : f32 to vector<1x256xf32>
    %72 = arith.subf %71, %21 : vector<1x256xf32>
    %73 = arith.mulf %72, %22 : vector<1x256xf32>
    %74 = arith.mulf %21, %22 : vector<1x256xf32>
    %75 = tpu.iota {dimensions = array<i32: 0>} : vector<256x256xi32>
    %76 = vector.broadcast %50 : vector<1x256xi32> to vector<256x256xi32>
    %77 = arith.cmpi eq, %75, %76 : vector<256x256xi32>
    %cst_22 = arith.constant 0.000000e+00 : f32
    %78 = vector.shape_cast %67 : vector<1x256xf32> to vector<1x256xf32>
    %79 = vector.broadcast %78 : vector<1x256xf32> to vector<256x256xf32>
    %80 = vector.broadcast %cst_22 : f32 to vector<256x256xf32>
    %81 = arith.select %77, %79, %80 : vector<256x256xi1>, vector<256x256xf32>
    %82 = vector.broadcast %54 : vector<1x256xi32> to vector<256x256xi32>
    %83 = arith.cmpi eq, %75, %82 : vector<256x256xi32>
    %cst_23 = arith.constant 0.000000e+00 : f32
    %84 = vector.shape_cast %70 : vector<1x256xf32> to vector<1x256xf32>
    %85 = vector.broadcast %84 : vector<1x256xf32> to vector<256x256xf32>
    %86 = vector.broadcast %cst_23 : f32 to vector<256x256xf32>
    %87 = arith.select %83, %85, %86 : vector<256x256xi1>, vector<256x256xf32>
    %88 = arith.addf %81, %87 : vector<256x256xf32>
    %89 = vector.broadcast %58 : vector<1x256xi32> to vector<256x256xi32>
    %90 = arith.cmpi eq, %75, %89 : vector<256x256xi32>
    %cst_24 = arith.constant 0.000000e+00 : f32
    %91 = vector.shape_cast %73 : vector<1x256xf32> to vector<1x256xf32>
    %92 = vector.broadcast %91 : vector<1x256xf32> to vector<256x256xf32>
    %93 = vector.broadcast %cst_24 : f32 to vector<256x256xf32>
    %94 = arith.select %90, %92, %93 : vector<256x256xi1>, vector<256x256xf32>
    %95 = arith.addf %88, %94 : vector<256x256xf32>
    %96 = vector.broadcast %62 : vector<1x256xi32> to vector<256x256xi32>
    %97 = arith.cmpi eq, %75, %96 : vector<256x256xi32>
    %cst_25 = arith.constant 0.000000e+00 : f32
    %98 = vector.shape_cast %74 : vector<1x256xf32> to vector<1x256xf32>
    %99 = vector.broadcast %98 : vector<1x256xf32> to vector<256x256xf32>
    %100 = vector.broadcast %cst_25 : f32 to vector<256x256xf32>
    %101 = arith.select %97, %99, %100 : vector<256x256xi1>, vector<256x256xf32>
    %102 = arith.addf %95, %101 : vector<256x256xf32>
    %c0_26 = arith.constant 0 : index
    %c0_27 = arith.constant 0 : index
    %c0_28 = arith.constant 0 : index
    %103 = vector.load %arg1[%c0_26, %c0_27, %c0_28] : memref<1x3x256xf32, #tpu.memory_space<vmem>>, vector<1x3x256xf32>
    %104 = vector.shape_cast %103 : vector<1x3x256xf32> to vector<3x256xf32>
    %cst_29 = arith.constant dense<0.000000e+00> : vector<3x256xf32>
    %105 = tpu.matmul %104, %102, %cst_29 {dimension_numbers = #tpu.dot_dimension_numbers<[1], [0], [0], [1], [0, 0, 1, 1], [], []>, precision = #tpu.contract_precision<fp32>} : vector<3x256xf32>, vector<256x256xf32>, vector<3x256xf32> -> vector<3x256xf32>
    %c0_30 = arith.constant 0 : index
    %c0_31 = arith.constant 0 : index
    %c0_32 = arith.constant 0 : index
    %106 = vector.load %arg2[%c0_30, %c0_31, %c0_32] : memref<1x3x256xf32, #tpu.memory_space<vmem>>, vector<1x3x256xf32>
    %107 = vector.shape_cast %106 : vector<1x3x256xf32> to vector<3x256xf32>
    %c0_33 = arith.constant 0 : index
    %c0_34 = arith.constant 0 : index
    %108 = vector.load %arg7[%c0_33, %c0_34] : memref<3x256xf32, #tpu.memory_space<vmem>>, vector<3x256xf32>
    %109 = arith.subf %107, %105 : vector<3x256xf32>
    %110 = math.absf %109 : vector<3x256xf32>
    %111 = arith.addf %108, %110 : vector<3x256xf32>
    %c0_35 = arith.constant 0 : index
    %c0_36 = arith.constant 0 : index
    %112 = vector.load %arg7[%c0_35, %c0_36] : memref<3x256xf32, #tpu.memory_space<vmem>>, vector<3x256xf32>
    tpu.vector_store %arg7[%c0_35, %c0_36], %111 {strides = array<i32>} : memref<3x256xf32, #tpu.memory_space<vmem>>, vector<3x256xf32>,
    %c0_37 = arith.constant 0 : index
    %c0_38 = arith.constant 0 : index
    %c0_39 = arith.constant 0 : index
    %c0_40 = arith.constant 0 : index
    %113 = vector.load %arg4[%c0_37, %c0_38, %c0_39, %c0_40] : memref<1x2x16x16xf32, #tpu.memory_space<vmem>>, vector<1x2x16x16xf32>
    %114 = vector.shape_cast %113 : vector<1x2x16x16xf32> to vector<2x16x16xf32>
    %c0_41 = arith.constant 0 : index
    %c0_42 = arith.constant 0 : index
    %c0_43 = arith.constant 0 : index
    %115 = vector.load %arg8[%c0_41, %c0_42, %c0_43] : memref<2x16x15xf32, #tpu.memory_space<vmem>>, vector<2x16x15xf32>
    %116 = vector.extract_strided_slice %114 {offsets = [0, 0, 1], sizes = [2, 16, 15], strides = [1, 1, 1]} : vector<2x16x16xf32> to vector<2x16x15xf32>
    %117 = vector.extract_strided_slice %114 {offsets = [0, 0, 0], sizes = [2, 16, 15], strides = [1, 1, 1]} : vector<2x16x16xf32> to vector<2x16x15xf32>
    %118 = arith.subf %116, %117 : vector<2x16x15xf32>
    %119 = math.absf %118 : vector<2x16x15xf32>
    %120 = arith.addf %115, %119 : vector<2x16x15xf32>
    %c0_44 = arith.constant 0 : index
    %c0_45 = arith.constant 0 : index
    %c0_46 = arith.constant 0 : index
    %121 = vector.load %arg8[%c0_44, %c0_45, %c0_46] : memref<2x16x15xf32, #tpu.memory_space<vmem>>, vector<2x16x15xf32>
    tpu.vector_store %arg8[%c0_44, %c0_45, %c0_46], %120 {strides = array<i32>} : memref<2x16x15xf32, #tpu.memory_space<vmem>>, vector<2x16x15xf32>,
    %c0_47 = arith.constant 0 : index
    %c0_48 = arith.constant 0 : index
    %c0_49 = arith.constant 0 : index
    %122 = vector.load %arg9[%c0_47, %c0_48, %c0_49] : memref<2x15x16xf32, #tpu.memory_space<vmem>>, vector<2x15x16xf32>
    %123 = vector.extract_strided_slice %114 {offsets = [0, 1, 0], sizes = [2, 15, 16], strides = [1, 1, 1]} : vector<2x16x16xf32> to vector<2x15x16xf32>
    %124 = vector.extract_strided_slice %114 {offsets = [0, 0, 0], sizes = [2, 15, 16], strides = [1, 1, 1]} : vector<2x16x16xf32> to vector<2x15x16xf32>
    %125 = arith.subf %123, %124 : vector<2x15x16xf32>
    %126 = math.absf %125 : vector<2x15x16xf32>
    %127 = arith.addf %122, %126 : vector<2x15x16xf32>
    %c0_50 = arith.constant 0 : index
    %c0_51 = arith.constant 0 : index
    %c0_52 = arith.constant 0 : index
    %128 = vector.load %arg9[%c0_50, %c0_51, %c0_52] : memref<2x15x16xf32, #tpu.memory_space<vmem>>, vector<2x15x16xf32>
    tpu.vector_store %arg9[%c0_50, %c0_51, %c0_52], %127 {strides = array<i32>} : memref<2x15x16xf32, #tpu.memory_space<vmem>>, vector<2x15x16xf32>,
    %c1_i32 = arith.constant 1 : i32
    %129 = arith.cmpi eq, %arg0, %c1_i32 : i32
    %130 = arith.extui %129 : i1 to i32
    %c0_i32_53 = arith.constant 0 : i32
    %131 = arith.cmpi ne, %130, %c0_i32_53 : i32
    scf.if %131 {
      %c0_54 = arith.constant 0 : index
      %c0_55 = arith.constant 0 : index
      %132 = vector.load %arg7[%c0_54, %c0_55] : memref<3x256xf32, #tpu.memory_space<vmem>>, vector<3x256xf32>
      %133 = vector.shape_cast %132 : vector<3x256xf32> to vector<1x3x256xf32>
      %cst_56 = arith.constant dense<0.000000e+00> : vector<1xf32>
      %134 = vector.multi_reduction <add>, %133, %cst_56 [1, 2] : vector<1x3x256xf32> to vector<1xf32>
      %135 = vector.shape_cast %134 : vector<1xf32> to vector<1x1x1xf32>
      %136 = vector.extract %135[0, 0, 0] : f32 from vector<1x1x1xf32>
      %c0_57 = arith.constant 0 : index
      %c0_58 = arith.constant 0 : index
      %137 = memref.load %arg5[%c0_57, %c0_58] : memref<1x1xf32, #tpu.memory_space<smem>>
      memref.store %136, %arg5[%c0_57, %c0_58] : memref<1x1xf32, #tpu.memory_space<smem>>
      %c0_59 = arith.constant 0 : index
      %c0_60 = arith.constant 0 : index
      %c0_61 = arith.constant 0 : index
      %138 = vector.load %arg8[%c0_59, %c0_60, %c0_61] : memref<2x16x15xf32, #tpu.memory_space<vmem>>, vector<2x16x15xf32>
      %139 = vector.shape_cast %138 : vector<2x16x15xf32> to vector<1x2x16x15xf32>
      %cst_62 = arith.constant dense<0.000000e+00> : vector<1xf32>
      %140 = vector.multi_reduction <add>, %139, %cst_62 [1, 2, 3] : vector<1x2x16x15xf32> to vector<1xf32>
      %141 = vector.shape_cast %140 : vector<1xf32> to vector<1x1x1x1xf32>
      %142 = vector.extract %141[0, 0, 0, 0] : f32 from vector<1x1x1x1xf32>
      %c0_63 = arith.constant 0 : index
      %c0_64 = arith.constant 0 : index
      %c0_65 = arith.constant 0 : index
      %143 = vector.load %arg9[%c0_63, %c0_64, %c0_65] : memref<2x15x16xf32, #tpu.memory_space<vmem>>, vector<2x15x16xf32>
      %144 = vector.shape_cast %143 : vector<2x15x16xf32> to vector<1x2x15x16xf32>
      %cst_66 = arith.constant dense<0.000000e+00> : vector<1xf32>
      %145 = vector.multi_reduction <add>, %144, %cst_66 [1, 2, 3] : vector<1x2x15x16xf32> to vector<1xf32>
      %146 = vector.shape_cast %145 : vector<1xf32> to vector<1x1x1x1xf32>
      %147 = vector.extract %146[0, 0, 0, 0] : f32 from vector<1x1x1x1xf32>
      %148 = arith.addf %142, %147 : f32
      %c0_67 = arith.constant 0 : index
      %c0_68 = arith.constant 0 : index
      %149 = memref.load %arg6[%c0_67, %c0_68] : memref<1x1xf32, #tpu.memory_space<smem>>
      memref.store %148, %arg6[%c0_67, %c0_68] : memref<1x1xf32, #tpu.memory_space<smem>>
    } else {
    }
    return
  }
  func.func @transform_0(%arg0: i32) -> (i32, i32, i32) {
    %c0_i32 = arith.constant 0 : i32
    %c0_i32_0 = arith.constant 0 : i32
    %c0_i32_1 = arith.constant 0 : i32
    return %arg0, %c0_i32, %c0_i32_0 : i32, i32, i32
  }
  func.func @transform_1(%arg0: i32) -> (i32, i32, i32) {
    %c0_i32 = arith.constant 0 : i32
    %c0_i32_0 = arith.constant 0 : i32
    %c0_i32_1 = arith.constant 0 : i32
    return %arg0, %c0_i32, %c0_i32_0 : i32, i32, i32
  }
  func.func @transform_2(%arg0: i32) -> (i32, i32, i32) {
    %c0_i32 = arith.constant 0 : i32
    %c0_i32_0 = arith.constant 0 : i32
    %c0_i32_1 = arith.constant 0 : i32
    return %arg0, %c0_i32, %c0_i32_0 : i32, i32, i32
  }
  func.func @transform_3(%arg0: i32) -> (i32, i32, i32, i32) {
    %c0_i32 = arith.constant 0 : i32
    %c0_i32_0 = arith.constant 0 : i32
    %c0_i32_1 = arith.constant 0 : i32
    %c0_i32_2 = arith.constant 0 : i32
    return %arg0, %c0_i32, %c0_i32_0, %c0_i32_1 : i32, i32, i32, i32
  }
  func.func @transform_4(%arg0: i32) -> (i32, i32) {
    %c0_i32 = arith.constant 0 : i32
    %c0_i32_0 = arith.constant 0 : i32
    %c0_i32_1 = arith.constant 0 : i32
    return %c0_i32, %c0_i32_0 : i32, i32
  }
  func.func @transform_5(%arg0: i32) -> (i32, i32) {
    %c0_i32 = arith.constant 0 : i32
    %c0_i32_0 = arith.constant 0 : i32
    %c0_i32_1 = arith.constant 0 : i32
    return %c0_i32, %c0_i32_0 : i32, i32
  }
}

</mosaic_0001>

<llo_original>
// kernel: ofr_loss.1
$region0: #{ofr_loss.1}
  #allocation0 [shape = 'u32[]', space=smem, size = 0x4, offset = 0x4, fixed_abs, tag = 'smem constant byte address 0x4 - core index']
  #allocation1 [shape = 'u32[144,128]{1,0:T(1,128)}', space=vmem, size = 0x12000, scoped, tag = 'internal scratch']
  #allocation2 [shape = 'f32[3,256]{1,0:T(4,128)}', space=vmem, size = 0x1000, scoped, tag = 'scratch operand']
  #allocation3 [shape = 'f32[2,16,15]{2,1,0:T(8,128)}', space=vmem, size = 0x4000, scoped, tag = 'scratch operand']
  #allocation4 [shape = 'f32[2,15,16]{2,1,0:T(8,128)}', space=vmem, size = 0x4000, scoped, tag = 'scratch operand']
  %s0 = inlined_call_operand.vmem [shape: f32[2,3,256], index: 0, kind: input, shape index: {}]
  %s1 = inlined_call_operand.vmem [shape: f32[2,3,256], index: 1, kind: input, shape index: {}]
  %s2 = inlined_call_operand.vmem [shape: f32[2,2,256], index: 2, kind: input, shape index: {}]
  %s3 = inlined_call_operand.vmem [shape: f32[2,2,16,16], index: 3, kind: input, shape index: {}]
  %s4 = inlined_call_operand.hbm [shape: f32[1,1], index: 4, kind: output, shape index: {0}]
  %s5 = inlined_call_operand.hbm [shape: f32[1,1], index: 5, kind: output, shape index: {1}]
  %6 = xla_tuple %s4, %s5
  %s7 = sld [smem:[#allocation0]]
  $region65: #{ofr_loss.1} parent=0
    _
  %s9 = ssub.s32 1, %s7
  %s10 = scalar_select 0, %s9, %s7
  $region1: #{ofr_loss.1} parent=0
    #allocation5 [shape = 'u8[512]{0}', space=smem, size = 0x200, scoped, tag = 'output window, operand 0, single buffered']
    #allocation6 [shape = 's32[2]{0}', space=sflag, size = 0x8, scoped, tag = 'scoped memory for ofr_loss.1']
    #allocation7 [shape = 'u8[512]{0}', space=smem, size = 0x200, scoped, tag = 'output window, operand 1, single buffered']
    #allocation8 [shape = 's32[1]{0}', space=sflag, size = 0x4, scoped, tag = 'scoped memory for ofr_loss.1']
    %11 = vsyncpa [#allocation6], 0
    %12 = vsyncpa [#allocation8], 0
    loop: start=0, step=1, limit=4
    $region2: #{ofr_loss.1} parent=1 // loop_pre_header
      _
    $region3: #{ofr_loss.1} parent=1 // loop_header
      %s14 = sphi 0, %s18
      %p15 = scmp.ge.s32.totalorder %s14, 4
      %s24 = sphi 0, %s26
      %s27 = sphi 0, %s24
      %s28 = sphi 0, %s27
      %s44 = sphi 0, %s28
      %s50 = sphi 0, %s52
      %s53 = sphi 0, %s50
      %s54 = sphi 0, %s53
      %s70 = sphi 0, %s54
      %s76 = sphi 0, %s78
      %s79 = sphi 0, %s76
      %s80 = sphi 0, %s79
      %s96 = sphi 0, %s80
      %s102 = sphi 0, %s104
      %s105 = sphi 0, %s102
      %s106 = sphi 0, %s105
      %s122 = sphi 0, %s106
      %s126 = sphi 0, %s126
      %s128 = sphi 0, %s126
      %s129 = sphi 0, %s128
      %s143 = sphi 0, %s129
      %s147 = sphi 0, %s147
      %s149 = sphi 0, %s147
      %s150 = sphi 0, %s149
      %s164 = sphi 0, %s150
    $region4: #{ofr_loss.1} parent=1 // loop_header_branch
      %17 = sbr.rel (%p15) target = $region8
    $region5: #{ofr_loss.1} parent=1 // loop_body
      %s19 = ssub.s32 %s14, 1
      %s20 = ssub.s32 %s14, 2
      %s21 = sadd.s32 %s14, 1
      %s22 = ssub.s32 %s14, %s21
      %p23 = scmp.eq.s32.totalorder %s22, 0
      %s25 = sadd.s32 %s24, 1
      %s26 = scalar_select %p23, %s24, %s25
      %p29 = pneg %p23
      %p30 = scmp.eq.s32.totalorder %s14, 1
      %p31 = por %p29, %p30
      %p32 = scmp.ne.s32.totalorder %s24, %s27
      %p33 = scmp.eq.s32.totalorder %s14, 0
      %p34 = por %p32, %p33
      %p35 = scmp.ne.s32.totalorder %s24, %s27
      %p36 = scmp.eq.s32.totalorder %s19, 1
      %p37 = por %p35, %p36
      %p38 = scmp.ne.s32.totalorder %s27, %s28
      %p39 = scmp.eq.s32.totalorder %s19, 0
      %p40 = por %p38, %p39
      %p41 = scmp.ne.s32.totalorder %s27, %s28
      %p42 = scmp.eq.s32.totalorder %s20, 1
      %p43 = por %p41, %p42
      %p45 = scmp.ne.s32.totalorder %s28, %s44
      %p46 = scmp.eq.s32.totalorder %s20, 0
      %p47 = por %p45, %p46
      %s48 = ssub.s32 %s14, %s21
      %p49 = scmp.eq.s32.totalorder %s48, 0
      %s51 = sadd.s32 %s50, 1
      %s52 = scalar_select %p49, %s50, %s51
      %p55 = pneg %p49
      %p56 = scmp.eq.s32.totalorder %s14, 1
      %p57 = por %p55, %p56
      %p58 = scmp.ne.s32.totalorder %s50, %s53
      %p59 = scmp.eq.s32.totalorder %s14, 0
      %p60 = por %p58, %p59
      %p61 = scmp.ne.s32.totalorder %s50, %s53
      %p62 = scmp.eq.s32.totalorder %s19, 1
      %p63 = por %p61, %p62
      %p64 = scmp.ne.s32.totalorder %s53, %s54
      %p65 = scmp.eq.s32.totalorder %s19, 0
      %p66 = por %p64, %p65
      %p67 = scmp.ne.s32.totalorder %s53, %s54
      %p68 = scmp.eq.s32.totalorder %s20, 1
      %p69 = por %p67, %p68
      %p71 = scmp.ne.s32.totalorder %s54, %s70
      %p72 = scmp.eq.s32.totalorder %s20, 0
      %p73 = por %p71, %p72
      %s74 = ssub.s32 %s14, %s21
      %p75 = scmp.eq.s32.totalorder %s74, 0
      %s77 = sadd.s32 %s76, 1
      %s78 = scalar_select %p75, %s76, %s77
      %p81 = pneg %p75
      %p82 = scmp.eq.s32.totalorder %s14, 1
      %p83 = por %p81, %p82
      %p84 = scmp.ne.s32.totalorder %s76, %s79
      %p85 = scmp.eq.s32.totalorder %s14, 0
      %p86 = por %p84, %p85
      %p87 = scmp.ne.s32.totalorder %s76, %s79
      %p88 = scmp.eq.s32.totalorder %s19, 1
      %p89 = por %p87, %p88
      %p90 = scmp.ne.s32.totalorder %s79, %s80
      %p91 = scmp.eq.s32.totalorder %s19, 0
      %p92 = por %p90, %p91
      %p93 = scmp.ne.s32.totalorder %s79, %s80
      %p94 = scmp.eq.s32.totalorder %s20, 1
      %p95 = por %p93, %p94
      %p97 = scmp.ne.s32.totalorder %s80, %s96
      %p98 = scmp.eq.s32.totalorder %s20, 0
      %p99 = por %p97, %p98
      %s100 = ssub.s32 %s14, %s21
      %p101 = scmp.eq.s32.totalorder %s100, 0
      %s103 = sadd.s32 %s102, 1
      %s104 = scalar_select %p101, %s102, %s103
      %p107 = pneg %p101
      %p108 = scmp.eq.s32.totalorder %s14, 1
      %p109 = por %p107, %p108
      %p110 = scmp.ne.s32.totalorder %s102, %s105
      %p111 = scmp.eq.s32.totalorder %s14, 0
      %p112 = por %p110, %p111
      %p113 = scmp.ne.s32.totalorder %s102, %s105
      %p114 = scmp.eq.s32.totalorder %s19, 1
      %p115 = por %p113, %p114
      %p116 = scmp.ne.s32.totalorder %s105, %s106
      %p117 = scmp.eq.s32.totalorder %s19, 0
      %p118 = por %p116, %p117
      %p119 = scmp.ne.s32.totalorder %s105, %s106
      %p120 = scmp.eq.s32.totalorder %s20, 1
      %p121 = por %p119, %p120
      %p123 = scmp.ne.s32.totalorder %s106, %s122
      %p124 = scmp.eq.s32.totalorder %s20, 0
      %p125 = por %p123, %p124
      %s127 = sadd.s32 %s126, 1
      %p130 = scmp.eq.s32.totalorder %s14, 1
      %p131 = scmp.ne.s32.totalorder %s126, %s128
      %p132 = scmp.eq.s32.totalorder %s14, 0
      %p133 = por %p131, %p132
      %p134 = scmp.ne.s32.totalorder %s126, %s128
      %p135 = scmp.eq.s32.totalorder %s19, 1
      %p136 = por %p134, %p135
      %p137 = scmp.ne.s32.totalorder %s128, %s129
      %p138 = scmp.eq.s32.totalorder %s19, 0
      %p139 = por %p137, %p138
      %p140 = scmp.ne.s32.totalorder %s128, %s129
      %p141 = scmp.eq.s32.totalorder %s20, 1
      %p142 = por %p140, %p141
      %p144 = scmp.ne.s32.totalorder %s129, %s143
      %p145 = scmp.eq.s32.totalorder %s20, 0
      %p146 = por %p144, %p145
      %s148 = sadd.s32 %s147, 1
      %p151 = scmp.eq.s32.totalorder %s14, 1
      %p152 = scmp.ne.s32.totalorder %s147, %s149
      %p153 = scmp.eq.s32.totalorder %s14, 0
      %p154 = por %p152, %p153
      %p155 = scmp.ne.s32.totalorder %s147, %s149
      %p156 = scmp.eq.s32.totalorder %s19, 1
      %p157 = por %p155, %p156
      %p158 = scmp.ne.s32.totalorder %s149, %s150
      %p159 = scmp.eq.s32.totalorder %s19, 0
      %p160 = por %p158, %p159
      %p161 = scmp.ne.s32.totalorder %s149, %s150
      %p162 = scmp.eq.s32.totalorder %s20, 1
      %p163 = por %p161, %p162
      %p165 = scmp.ne.s32.totalorder %s150, %s164
      %p166 = scmp.eq.s32.totalorder %s20, 0
      %p167 = por %p165, %p166
      %p168 = scmp.le.s32.totalorder 1, %s14
      %p169 = scmp.lt.s32.totalorder %s14, 3
      %p170 = pnand %p168, %p169
      %p171 = pneg %p170
      // Predicated region
      $region9: #{ofr_loss.1} parent=5 // pred_check
        _
      $region10: #{ofr_loss.1} parent=5 // pred_check_branch
        %173 = sbr.rel (%p170) target = $region12
      $region11: #{ofr_loss.1} parent=5 // pred_region
        %s174 = ssub.s32 %s14, 1
      $region12: #{ofr_loss.1} parent=5 // pred_fallthru
        _
      %p175 = scmp.lt.s32.totalorder %s14, 2
      // Predicated region
      $region13: #{ofr_loss.1} parent=5 // pred_check
        %p176 = pneg %p175
      $region14: #{ofr_loss.1} parent=5 // pred_check_branch
        %178 = sbr.rel (%p176) target = $region16
      $region15: #{ofr_loss.1} parent=5 // pred_region
        // Predicated region
        $region17: #{ofr_loss.1} parent=15 // pred_check
          %p179 = pneg %p34
        $region18: #{ofr_loss.1} parent=15 // pred_check_branch
          %181 = sbr.rel (%p179) target = $region20
        $region19: #{ofr_loss.1} parent=15 // pred_region
          %p182 = scmp.lt.s32.totalorder %s14, 1
          %s183 = scalar_select %p182, %s14, 1
          %s184 = smul.addr %s183, 2
          %s185 = smul.addr %s184, 4
          %s186 = scalar_lea.vmem %s0, %s185
        $region20: #{ofr_loss.1} parent=15 // pred_fallthru
          _
        // Predicated region
        $region21: #{ofr_loss.1} parent=15 // pred_check
          %p187 = pneg %p60
        $region22: #{ofr_loss.1} parent=15 // pred_check_branch
          %189 = sbr.rel (%p187) target = $region24
        $region23: #{ofr_loss.1} parent=15 // pred_region
          %p190 = scmp.lt.s32.totalorder %s14, 1
          %s191 = scalar_select %p190, %s14, 1
          %s192 = smul.addr %s191, 2
          %s193 = smul.addr %s192, 4
          %s194 = scalar_lea.vmem %s1, %s193
        $region24: #{ofr_loss.1} parent=15 // pred_fallthru
          _
        // Predicated region
        $region25: #{ofr_loss.1} parent=15 // pred_check
          %p195 = pneg %p86
        $region26: #{ofr_loss.1} parent=15 // pred_check_branch
          %197 = sbr.rel (%p195) target = $region28
        $region27: #{ofr_loss.1} parent=15 // pred_region
          %p198 = scmp.lt.s32.totalorder %s14, 1
          %s199 = scalar_select %p198, %s14, 1
          %s200 = smul.addr %s199, 2
          %s201 = smul.addr %s200, 2
          %s202 = scalar_lea.vmem %s2, %s201
        $region28: #{ofr_loss.1} parent=15 // pred_fallthru
          _
        // Predicated region
        $region29: #{ofr_loss.1} parent=15 // pred_check
          %p203 = pneg %p112
        $region30: #{ofr_loss.1} parent=15 // pred_check_branch
          %205 = sbr.rel (%p203) target = $region32
        $region31: #{ofr_loss.1} parent=15 // pred_region
          %p206 = scmp.lt.s32.totalorder %s14, 1
          %s207 = scalar_select %p206, %s14, 1
          %s208 = smul.addr %s207, 4
          %s209 = smul.addr %s208, 8
          %s210 = scalar_lea.vmem %s3, %s209
        $region32: #{ofr_loss.1} parent=15 // pred_fallthru
          _
      $region16: #{ofr_loss.1} parent=5 // pred_fallthru
        _
      %p211 = scmp.le.s32.totalorder 1, %s14
      %p212 = scmp.lt.s32.totalorder %s14, 3
      %p213 = pnand %p211, %p212
      %p214 = pneg %p213
      // Predicated region
      $region33: #{ofr_loss.1} parent=5 // pred_check
        _
      $region34: #{ofr_loss.1} parent=5 // pred_check_branch
        %216 = sbr.rel (%p213) target = $region36
      $region35: #{ofr_loss.1} parent=5 // pred_region
        %s217 = ssub.s32 %s14, 1
        %p218 = scmp.lt.s32.totalorder %s19, 1
        %s219 = scalar_select %p218, %s19, 1
        %s220 = smul.addr %s219, 2
        %s221 = smul.addr %s220, 4
        %s222 = scalar_lea.vmem %s0, %s221
        %p223 = pneg %p40
        %p224 = pneg %p37
        %p225 = scmp.lt.s32.totalorder %s19, 1
        %s226 = scalar_select %p225, %s19, 1
        %s227 = smul.addr %s226, 2
        %s228 = smul.addr %s227, 4
        %s229 = scalar_lea.vmem %s1, %s228
        %p230 = pneg %p66
        %p231 = pneg %p63
        %p232 = scmp.lt.s32.totalorder %s19, 1
        %s233 = scalar_select %p232, %s19, 1
        %s234 = smul.addr %s233, 2
        %s235 = smul.addr %s234, 2
        %s236 = scalar_lea.vmem %s2, %s235
        %p237 = pneg %p92
        %p238 = pneg %p89
        %p239 = scmp.lt.s32.totalorder %s19, 1
        %s240 = scalar_select %p239, %s19, 1
        %s241 = smul.addr %s240, 4
        %s242 = smul.addr %s241, 8
        %s243 = scalar_lea.vmem %s3, %s242
        %p244 = pneg %p118
        %p245 = pneg %p115
        %p246 = pneg %p139
        %p247 = pneg %p136
        %p248 = pneg %p160
        %p249 = pneg %p157
        %p250 = scmp.lt.s32.totalorder %s19, 1
        %s251 = scalar_select %p250, %s19, 1
        %s252 = smul.addr %s251, 2
        %s253 = smul.addr %s252, 4
        %s254 = scalar_lea.vmem %s0, %s253
        %p255 = scmp.lt.s32.totalorder %s19, 1
        %s256 = scalar_select %p255, %s19, 1
        %s257 = smul.addr %s256, 2
        %s258 = smul.addr %s257, 4
        %s259 = scalar_lea.vmem %s1, %s258
        %p260 = scmp.lt.s32.totalorder %s19, 1
        %s261 = scalar_select %p260, %s19, 1
        %s262 = smul.addr %s261, 2
        %s263 = smul.addr %s262, 2
        %s264 = scalar_lea.vmem %s2, %s263
        %p265 = scmp.lt.s32.totalorder %s19, 1
        %s266 = scalar_select %p265, %s19, 1
        %s267 = smul.addr %s266, 4
        %s268 = smul.addr %s267, 8
        %s269 = scalar_lea.vmem %s3, %s268
        %p270 = scmp.eq.s32.totalorder %s19, 0
        // Predicated region
        $region37: #{ofr_loss.1} parent=35 // pred_check
          %p271 = pneg %p270
        $region38: #{ofr_loss.1} parent=35 // pred_check_branch
          %273 = sbr.rel (%p271) target = $region40
        $region39: #{ofr_loss.1} parent=35 // pred_region
          %274 = vst [vmem:[#allocation2] sm:$0x77] 0.0
          %vm275 = vcmask 121856
          %276 = vst.msk [vmem:[#allocation3] sm:$0xff] %vm275, 0.0
          %277 = vst.msk [vmem:[#allocation3 + $0x8] sm:$0xff] %vm275, 0.0
          %278 = vst.msk [vmem:[#allocation3 + $0x10] sm:$0xff] %vm275, 0.0
          %279 = vst.msk [vmem:[#allocation3 + $0x18] sm:$0xff] %vm275, 0.0
          %vm280 = vcmask 130048
          %281 = vst.msk [vmem:[#allocation4] sm:$0xff] %vm280, 0.0
          %vm282 = vcmask 129024
          %283 = vst.msk [vmem:[#allocation4 + $0x8] sm:$0x7f] %vm282, 0.0
          %284 = vst.msk [vmem:[#allocation4 + $0x10] sm:$0xff] %vm280, 0.0
          %285 = vst.msk [vmem:[#allocation4 + $0x18] sm:$0x7f] %vm282, 0.0
        $region40: #{ofr_loss.1} parent=35 // pred_fallthru
          _
        %v286 = vld [vmem:[%s264] sm:$0xf]
        %v287 = vlaneseq
        %v288 = vand.u32 %v287, 127
        %v289 = vadd.s32 %v288, 128
        %v290 = vcvt.s32.f32 %v288
        %v291 = vcvt.s32.f32 %v289
        %v292 = vadd.f32 %v290, 0.5
        %v293 = vadd.f32 %v291, 0.5
        %v294 = vrcp.pop 16.0
        %v295 = vmul.f32 %v292, %v294
        %v296 = vmul.f32 %v293, %v294
        %v297 = vfloor.f32 %v295
        %v298 = vfloor.f32 %v296
        %v299 = vmul.f32 %v297, 16.0
        %v300 = vmul.f32 %v298, 16.0
        %v301 = vsub.f32 %v290, %v299
        %v302 = vsub.f32 %v291, %v300
        %v304 = vlaneseq
        %v305 = vshrl.u32 %v304, 7
        %v306 = vsub.s32 0, %v305
        %v307 = vrot.slane %v286, %v306
        %v308 = vlaneseq
        %v309 = vshrl.u32 %v308, 7
        %v310 = vsub.s32 2, %v309
        %v311 = vrot.slane %v286, %v310
        %v314 = vadd.f32 %v301, %v307
        %v315 = vadd.f32 %v302, %v311
        %v316 = vlaneseq
        %v317 = vshrl.u32 %v316, 7
        %v318 = vsub.s32 1, %v317
        %v319 = vrot.slane %v286, %v318
        %v320 = vlaneseq
        %v321 = vshrl.u32 %v320, 7
        %v322 = vsub.s32 3, %v321
        %v323 = vrot.slane %v286, %v322
        %v326 = vadd.f32 %v297, %v319
        %v327 = vadd.f32 %v298, %v323
        %v328 = vfloor.f32 %v314
        %v329 = vfloor.f32 %v315
        %v330 = vfloor.f32 %v326
        %v331 = vfloor.f32 %v327
        %v332 = vsub.f32 %v314, %v328
        %v333 = vsub.f32 %v315, %v329
        %v334 = vsub.f32 %v326, %v330
        %v335 = vsub.f32 %v327, %v331
        %v336 = vmax.f32 %v328, 0.0
        %v337 = vmax.f32 %v329, 0.0
        %v338 = vmin.f32 %v336, 15.0
        %v339 = vmin.f32 %v337, 15.0
        %v340 = vadd.f32 %v328, 1.0
        %v341 = vadd.f32 %v329, 1.0
        %v342 = vmax.f32 %v340, 0.0
        %v343 = vmax.f32 %v341, 0.0
        %v344 = vmin.f32 %v342, 15.0
        %v345 = vmin.f32 %v343, 15.0
        %v346 = vmax.f32 %v330, 0.0
        %v347 = vmax.f32 %v331, 0.0
        %v348 = vmin.f32 %v346, 15.0
        %v349 = vmin.f32 %v347, 15.0
        %v350 = vadd.f32 %v330, 1.0
        %v351 = vadd.f32 %v331, 1.0
        %v352 = vmax.f32 %v350, 0.0
        %v353 = vmax.f32 %v351, 0.0
        %v354 = vmin.f32 %v352, 15.0
        %v355 = vmin.f32 %v353, 15.0
        %v356 = vmul.f32 %v348, 16.0
        %v357 = vmul.f32 %v349, 16.0
        %v358 = vadd.f32 %v356, %v338
        %v359 = vadd.f32 %v357, %v339
        %v360 = vcvt.f32.s32.to.zero.pseudo %v358
        %v361 = vcvt.f32.s32.to.zero.pseudo %v359
        %v362 = vadd.f32 %v356, %v344
        %v363 = vadd.f32 %v357, %v345
        %v364 = vcvt.f32.s32.to.zero.pseudo %v362
        %v365 = vcvt.f32.s32.to.zero.pseudo %v363
        %v366 = vmul.f32 %v354, 16.0
        %v367 = vmul.f32 %v355, 16.0
        %v368 = vadd.f32 %v366, %v338
        %v369 = vadd.f32 %v367, %v339
        %v370 = vcvt.f32.s32.to.zero.pseudo %v368
        %v371 = vcvt.f32.s32.to.zero.pseudo %v369
        %v372 = vadd.f32 %v366, %v344
        %v373 = vadd.f32 %v367, %v345
        %v374 = vcvt.f32.s32.to.zero.pseudo %v372
        %v375 = vcvt.f32.s32.to.zero.pseudo %v373
        %v376 = vsub.f32 1.0, %v332
        %v377 = vsub.f32 1.0, %v333
        %v378 = vsub.f32 1.0, %v334
        %v379 = vsub.f32 1.0, %v335
        %v380 = vmul.f32 %v376, %v378
        %v381 = vmul.f32 %v377, %v379
        %v382 = vmul.f32 %v332, %v378
        %v383 = vmul.f32 %v333, %v379
        %v384 = vmul.f32 %v376, %v334
        %v385 = vmul.f32 %v377, %v335
        %v386 = vmul.f32 %v332, %v334
        %v387 = vmul.f32 %v333, %v335
        %v388 = vlaneseq
        %v389 = vshrl.u32 %v388, 7
        %v390 = vadd.s32 %v389, 8
        %v391 = vadd.s32 %v389, 16
        %v392 = vadd.s32 %v389, 24
        %v393 = vadd.s32 %v389, 32
        %v394 = vadd.s32 %v389, 40
        %v395 = vadd.s32 %v389, 48
        %v396 = vadd.s32 %v389, 56
        %v397 = vadd.s32 %v389, 64
        %v398 = vadd.s32 %v389, 72
        %v399 = vadd.s32 %v389, 80
        %v400 = vadd.s32 %v389, 88
        %v401 = vadd.s32 %v389, 96
        %v402 = vadd.s32 %v389, 104
        %v403 = vadd.s32 %v389, 112
        %v404 = vadd.s32 %v389, 120
        %v405 = vadd.s32 %v389, 128
        %v406 = vadd.s32 %v389, 136
        %v407 = vadd.s32 %v389, 144
        %v408 = vadd.s32 %v389, 152
        %v409 = vadd.s32 %v389, 160
        %v410 = vadd.s32 %v389, 168
        %v411 = vadd.s32 %v389, 176
        %v412 = vadd.s32 %v389, 184
        %v413 = vadd.s32 %v389, 192
        %v414 = vadd.s32 %v389, 200
        %v415 = vadd.s32 %v389, 208
        %v416 = vadd.s32 %v389, 216
        %v417 = vadd.s32 %v389, 224
        %v418 = vadd.s32 %v389, 232
        %v419 = vadd.s32 %v389, 240
        %v420 = vadd.s32 %v389, 248
        %v421 = vlaneseq
        %v422 = vshrl.u32 %v421, 7
        %v423 = vsub.s32 0, %v422
        %v424 = vrot.slane %v360, %v423
        %v425 = vlaneseq
        %v426 = vshrl.u32 %v425, 7
        %v427 = vsub.s32 0, %v426
        %v428 = vrot.slane %v361, %v427
        %vm429 = vcmp.eq.s32.totalorder %v389, %v424
        %vm430 = vcmp.eq.s32.totalorder %v389, %v428
        %vm431 = vcmp.eq.s32.totalorder %v390, %v424
        %vm432 = vcmp.eq.s32.totalorder %v390, %v428
        %vm433 = vcmp.eq.s32.totalorder %v391, %v424
        %vm434 = vcmp.eq.s32.totalorder %v391, %v428
        %vm435 = vcmp.eq.s32.totalorder %v392, %v424
        %vm436 = vcmp.eq.s32.totalorder %v392, %v428
        %vm437 = vcmp.eq.s32.totalorder %v393, %v424
        %vm438 = vcmp.eq.s32.totalorder %v393, %v428
        %vm439 = vcmp.eq.s32.totalorder %v394, %v424
        %vm440 = vcmp.eq.s32.totalorder %v394, %v428
        %vm441 = vcmp.eq.s32.totalorder %v395, %v424
        %vm442 = vcmp.eq.s32.totalorder %v395, %v428
        %vm443 = vcmp.eq.s32.totalorder %v396, %v424
        %vm444 = vcmp.eq.s32.totalorder %v396, %v428
        %vm445 = vcmp.eq.s32.totalorder %v397, %v424
        %vm446 = vcmp.eq.s32.totalorder %v397, %v428
        %vm447 = vcmp.eq.s32.totalorder %v398, %v424
        %vm448 = vcmp.eq.s32.totalorder %v398, %v428
        %vm449 = vcmp.eq.s32.totalorder %v399, %v424
        %vm450 = vcmp.eq.s32.totalorder %v399, %v428
        %vm451 = vcmp.eq.s32.totalorder %v400, %v424
        %vm452 = vcmp.eq.s32.totalorder %v400, %v428
        %vm453 = vcmp.eq.s32.totalorder %v401, %v424
        %vm454 = vcmp.eq.s32.totalorder %v401, %v428
        %vm455 = vcmp.eq.s32.totalorder %v402, %v424
        %vm456 = vcmp.eq.s32.totalorder %v402, %v428
        %vm457 = vcmp.eq.s32.totalorder %v403, %v424
        %vm458 = vcmp.eq.s32.totalorder %v403, %v428
        %vm459 = vcmp.eq.s32.totalorder %v404, %v424
        %vm460 = vcmp.eq.s32.totalorder %v404, %v428
        %vm461 = vcmp.eq.s32.totalorder %v405, %v424
        %vm462 = vcmp.eq.s32.totalorder %v405, %v428
        %vm463 = vcmp.eq.s32.totalorder %v406, %v424
        %vm464 = vcmp.eq.s32.totalorder %v406, %v428
        %vm465 = vcmp.eq.s32.totalorder %v407, %v424
        %vm466 = vcmp.eq.s32.totalorder %v407, %v428
        %vm467 = vcmp.eq.s32.totalorder %v408, %v424
        %vm468 = vcmp.eq.s32.totalorder %v408, %v428
        %vm469 = vcmp.eq.s32.totalorder %v409, %v424
        %vm470 = vcmp.eq.s32.totalorder %v409, %v428
        %vm471 = vcmp.eq.s32.totalorder %v410, %v424
        %vm472 = vcmp.eq.s32.totalorder %v410, %v428
        %vm473 = vcmp.eq.s32.totalorder %v411, %v424
        %vm474 = vcmp.eq.s32.totalorder %v411, %v428
        %vm475 = vcmp.eq.s32.totalorder %v412, %v424
        %vm476 = vcmp.eq.s32.totalorder %v412, %v428
        %vm477 = vcmp.eq.s32.totalorder %v413, %v424
        %vm478 = vcmp.eq.s32.totalorder %v413, %v428
        %vm479 = vcmp.eq.s32.totalorder %v414, %v424
        %vm480 = vcmp.eq.s32.totalorder %v414, %v428
        %vm481 = vcmp.eq.s32.totalorder %v415, %v424
        %vm482 = vcmp.eq.s32.totalorder %v415, %v428
        %vm483 = vcmp.eq.s32.totalorder %v416, %v424
        %vm484 = vcmp.eq.s32.totalorder %v416, %v428
        %vm485 = vcmp.eq.s32.totalorder %v417, %v424
        %vm486 = vcmp.eq.s32.totalorder %v417, %v428
        %vm487 = vcmp.eq.s32.totalorder %v418, %v424
        %vm488 = vcmp.eq.s32.totalorder %v418, %v428
        %vm489 = vcmp.eq.s32.totalorder %v419, %v424
        %vm490 = vcmp.eq.s32.totalorder %v419, %v428
        %vm491 = vcmp.eq.s32.totalorder %v420, %v424
        %vm492 = vcmp.eq.s32.totalorder %v420, %v428
        %v493 = vlaneseq
        %v494 = vshrl.u32 %v493, 7
        %v495 = vsub.s32 0, %v494
        %v496 = vrot.slane %v380, %v495
        %v497 = vlaneseq
        %v498 = vshrl.u32 %v497, 7
        %v499 = vsub.s32 0, %v498
        %v500 = vrot.slane %v381, %v499
        %v501 = vsel %vm429, %v496, 0.0
        %v502 = vsel %vm430, %v500, 0.0
        %v503 = vsel %vm431, %v496, 0.0
        %v504 = vsel %vm432, %v500, 0.0
        %v505 = vsel %vm433, %v496, 0.0
        %v506 = vsel %vm434, %v500, 0.0
        %v507 = vsel %vm435, %v496, 0.0
        %v508 = vsel %vm436, %v500, 0.0
        %v509 = vsel %vm437, %v496, 0.0
        %v510 = vsel %vm438, %v500, 0.0
        %v511 = vsel %vm439, %v496, 0.0
        %v512 = vsel %vm440, %v500, 0.0
        %v513 = vsel %vm441, %v496, 0.0
        %v514 = vsel %vm442, %v500, 0.0
        %v515 = vsel %vm443, %v496, 0.0
        %v516 = vsel %vm444, %v500, 0.0
        %v517 = vsel %vm445, %v496, 0.0
        %v518 = vsel %vm446, %v500, 0.0
        %v519 = vsel %vm447, %v496, 0.0
        %v520 = vsel %vm448, %v500, 0.0
        %v521 = vsel %vm449, %v496, 0.0
        %v522 = vsel %vm450, %v500, 0.0
        %v523 = vsel %vm451, %v496, 0.0
        %v524 = vsel %vm452, %v500, 0.0
        %v525 = vsel %vm453, %v496, 0.0
        %v526 = vsel %vm454, %v500, 0.0
        %v527 = vsel %vm455, %v496, 0.0
        %v528 = vsel %vm456, %v500, 0.0
        %v529 = vsel %vm457, %v496, 0.0
        %v530 = vsel %vm458, %v500, 0.0
        %v531 = vsel %vm459, %v496, 0.0
        %v532 = vsel %vm460, %v500, 0.0
        %v533 = vsel %vm461, %v496, 0.0
        %v534 = vsel %vm462, %v500, 0.0
        %v535 = vsel %vm463, %v496, 0.0
        %v536 = vsel %vm464, %v500, 0.0
        %v537 = vsel %vm465, %v496, 0.0
        %v538 = vsel %vm466, %v500, 0.0
        %v539 = vsel %vm467, %v496, 0.0
        %v540 = vsel %vm468, %v500, 0.0
        %v541 = vsel %vm469, %v496, 0.0
        %v542 = vsel %vm470, %v500, 0.0
        %v543 = vsel %vm471, %v496, 0.0
        %v544 = vsel %vm472, %v500, 0.0
        %v545 = vsel %vm473, %v496, 0.0
        %v546 = vsel %vm474, %v500, 0.0
        %v547 = vsel %vm475, %v496, 0.0
        %v548 = vsel %vm476, %v500, 0.0
        %v549 = vsel %vm477, %v496, 0.0
        %v550 = vsel %vm478, %v500, 0.0
        %v551 = vsel %vm479, %v496, 0.0
        %v552 = vsel %vm480, %v500, 0.0
        %v553 = vsel %vm481, %v496, 0.0
        %v554 = vsel %vm482, %v500, 0.0
        %v555 = vsel %vm483, %v496, 0.0
        %v556 = vsel %vm484, %v500, 0.0
        %v557 = vsel %vm485, %v496, 0.0
        %v558 = vsel %vm486, %v500, 0.0
        %v559 = vsel %vm487, %v496, 0.0
        %v560 = vsel %vm488, %v500, 0.0
        %v561 = vsel %vm489, %v496, 0.0
        %v562 = vsel %vm490, %v500, 0.0
        %v563 = vsel %vm491, %v496, 0.0
        %v564 = vsel %vm492, %v500, 0.0
        %v565 = vlaneseq
        %v566 = vshrl.u32 %v565, 7
        %v567 = vsub.s32 0, %v566
        %v568 = vrot.slane %v364, %v567
        %v569 = vlaneseq
        %v570 = vshrl.u32 %v569, 7
        %v571 = vsub.s32 0, %v570
        %v572 = vrot.slane %v365, %v571
        %vm573 = vcmp.eq.s32.totalorder %v389, %v568
        %vm574 = vcmp.eq.s32.totalorder %v389, %v572
        %vm575 = vcmp.eq.s32.totalorder %v390, %v568
        %vm576 = vcmp.eq.s32.totalorder %v390, %v572
        %vm577 = vcmp.eq.s32.totalorder %v391, %v568
        %vm578 = vcmp.eq.s32.totalorder %v391, %v572
        %vm579 = vcmp.eq.s32.totalorder %v392, %v568
        %vm580 = vcmp.eq.s32.totalorder %v392, %v572
        %vm581 = vcmp.eq.s32.totalorder %v393, %v568
        %vm582 = vcmp.eq.s32.totalorder %v393, %v572
        %vm583 = vcmp.eq.s32.totalorder %v394, %v568
        %vm584 = vcmp.eq.s32.totalorder %v394, %v572
        %vm585 = vcmp.eq.s32.totalorder %v395, %v568
        %vm586 = vcmp.eq.s32.totalorder %v395, %v572
        %vm587 = vcmp.eq.s32.totalorder %v396, %v568
        %vm588 = vcmp.eq.s32.totalorder %v396, %v572
        %vm589 = vcmp.eq.s32.totalorder %v397, %v568
        %vm590 = vcmp.eq.s32.totalorder %v397, %v572
        %vm591 = vcmp.eq.s32.totalorder %v398, %v568
        %vm592 = vcmp.eq.s32.totalorder %v398, %v572
        %vm593 = vcmp.eq.s32.totalorder %v399, %v568
        %vm594 = vcmp.eq.s32.totalorder %v399, %v572
        %vm595 = vcmp.eq.s32.totalorder %v400, %v568
        %vm596 = vcmp.eq.s32.totalorder %v400, %v572
        %vm597 = vcmp.eq.s32.totalorder %v401, %v568
        %vm598 = vcmp.eq.s32.totalorder %v401, %v572
        %vm599 = vcmp.eq.s32.totalorder %v402, %v568
        %vm600 = vcmp.eq.s32.totalorder %v402, %v572
        %vm601 = vcmp.eq.s32.totalorder %v403, %v568
        %vm602 = vcmp.eq.s32.totalorder %v403, %v572
        %vm603 = vcmp.eq.s32.totalorder %v404, %v568
        %vm604 = vcmp.eq.s32.totalorder %v404, %v572
        %vm605 = vcmp.eq.s32.totalorder %v405, %v568
        %vm606 = vcmp.eq.s32.totalorder %v405, %v572
        %vm607 = vcmp.eq.s32.totalorder %v406, %v568
        %vm608 = vcmp.eq.s32.totalorder %v406, %v572
        %vm609 = vcmp.eq.s32.totalorder %v407, %v568
        %vm610 = vcmp.eq.s32.totalorder %v407, %v572
        %vm611 = vcmp.eq.s32.totalorder %v408, %v568
        %vm612 = vcmp.eq.s32.totalorder %v408, %v572
        %vm613 = vcmp.eq.s32.totalorder %v409, %v568
        %vm614 = vcmp.eq.s32.totalorder %v409, %v572
        %vm615 = vcmp.eq.s32.totalorder %v410, %v568
        %vm616 = vcmp.eq.s32.totalorder %v410, %v572
        %vm617 = vcmp.eq.s32.totalorder %v411, %v568
        %vm618 = vcmp.eq.s32.totalorder %v411, %v572
        %vm619 = vcmp.eq.s32.totalorder %v412, %v568
        %vm620 = vcmp.eq.s32.totalorder %v412, %v572
        %vm621 = vcmp.eq.s32.totalorder %v413, %v568
        %vm622 = vcmp.eq.s32.totalorder %v413, %v572
        %vm623 = vcmp.eq.s32.totalorder %v414, %v568
        %vm624 = vcmp.eq.s32.totalorder %v414, %v572
        %vm625 = vcmp.eq.s32.totalorder %v415, %v568
        %vm626 = vcmp.eq.s32.totalorder %v415, %v572
        %vm627 = vcmp.eq.s32.totalorder %v416, %v568
        %vm628 = vcmp.eq.s32.totalorder %v416, %v572
        %vm629 = vcmp.eq.s32.totalorder %v417, %v568
        %vm630 = vcmp.eq.s32.totalorder %v417, %v572
        %vm631 = vcmp.eq.s32.totalorder %v418, %v568
        %vm632 = vcmp.eq.s32.totalorder %v418, %v572
        %vm633 = vcmp.eq.s32.totalorder %v419, %v568
        %vm634 = vcmp.eq.s32.totalorder %v419, %v572
        %vm635 = vcmp.eq.s32.totalorder %v420, %v568
        %vm636 = vcmp.eq.s32.totalorder %v420, %v572
        %v637 = vlaneseq
        %v638 = vshrl.u32 %v637, 7
        %v639 = vsub.s32 0, %v638
        %v640 = vrot.slane %v382, %v639
        %v641 = vlaneseq
        %v642 = vshrl.u32 %v641, 7
        %v643 = vsub.s32 0, %v642
        %v644 = vrot.slane %v383, %v643
        %v645 = vsel %vm573, %v640, 0.0
        %v646 = vsel %vm574, %v644, 0.0
        %v647 = vsel %vm575, %v640, 0.0
        %v648 = vsel %vm576, %v644, 0.0
        %v649 = vsel %vm577, %v640, 0.0
        %v650 = vsel %vm578, %v644, 0.0
        %v651 = vsel %vm579, %v640, 0.0
        %v652 = vsel %vm580, %v644, 0.0
        %v653 = vsel %vm581, %v640, 0.0
        %v654 = vsel %vm582, %v644, 0.0
        %v655 = vsel %vm583, %v640, 0.0
        %v656 = vsel %vm584, %v644, 0.0
        %v657 = vsel %vm585, %v640, 0.0
        %v658 = vsel %vm586, %v644, 0.0
        %v659 = vsel %vm587, %v640, 0.0
        %v660 = vsel %vm588, %v644, 0.0
        %v661 = vsel %vm589, %v640, 0.0
        %v662 = vsel %vm590, %v644, 0.0
        %v663 = vsel %vm591, %v640, 0.0
        %v664 = vsel %vm592, %v644, 0.0
        %v665 = vsel %vm593, %v640, 0.0
        %v666 = vsel %vm594, %v644, 0.0
        %v667 = vsel %vm595, %v640, 0.0
        %v668 = vsel %vm596, %v644, 0.0
        %v669 = vsel %vm597, %v640, 0.0
        %v670 = vsel %vm598, %v644, 0.0
        %v671 = vsel %vm599, %v640, 0.0
        %v672 = vsel %vm600, %v644, 0.0
        %v673 = vsel %vm601, %v640, 0.0
        %v674 = vsel %vm602, %v644, 0.0
        %v675 = vsel %vm603, %v640, 0.0
        %v676 = vsel %vm604, %v644, 0.0
        %v677 = vsel %vm605, %v640, 0.0
        %v678 = vsel %vm606, %v644, 0.0
        %v679 = vsel %vm607, %v640, 0.0
        %v680 = vsel %vm608, %v644, 0.0
        %v681 = vsel %vm609, %v640, 0.0
        %v682 = vsel %vm610, %v644, 0.0
        %v683 = vsel %vm611, %v640, 0.0
        %v684 = vsel %vm612, %v644, 0.0
        %v685 = vsel %vm613, %v640, 0.0
        %v686 = vsel %vm614, %v644, 0.0
        %v687 = vsel %vm615, %v640, 0.0
        %v688 = vsel %vm616, %v644, 0.0
        %v689 = vsel %vm617, %v640, 0.0
        %v690 = vsel %vm618, %v644, 0.0
        %v691 = vsel %vm619, %v640, 0.0
        %v692 = vsel %vm620, %v644, 0.0
        %v693 = vsel %vm621, %v640, 0.0
        %v694 = vsel %vm622, %v644, 0.0
        %v695 = vsel %vm623, %v640, 0.0
        %v696 = vsel %vm624, %v644, 0.0
        %v697 = vsel %vm625, %v640, 0.0
        %v698 = vsel %vm626, %v644, 0.0
        %v699 = vsel %vm627, %v640, 0.0
        %v700 = vsel %vm628, %v644, 0.0
        %v701 = vsel %vm629, %v640, 0.0
        %v702 = vsel %vm630, %v644, 0.0
        %v703 = vsel %vm631, %v640, 0.0
        %v704 = vsel %vm632, %v644, 0.0
        %v705 = vsel %vm633, %v640, 0.0
        %v706 = vsel %vm634, %v644, 0.0
        %v707 = vsel %vm635, %v640, 0.0
        %v708 = vsel %vm636, %v644, 0.0
        %v709 = vadd.f32 %v501, %v645
        %v710 = vadd.f32 %v502, %v646
        %v711 = vadd.f32 %v503, %v647
        %v712 = vadd.f32 %v504, %v648
        %v713 = vadd.f32 %v505, %v649
        %v714 = vadd.f32 %v506, %v650
        %v715 = vadd.f32 %v507, %v651
        %v716 = vadd.f32 %v508, %v652
        %v717 = vadd.f32 %v509, %v653
        %v718 = vadd.f32 %v510, %v654
        %v719 = vadd.f32 %v511, %v655
        %v720 = vadd.f32 %v512, %v656
        %v721 = vadd.f32 %v513, %v657
        %v722 = vadd.f32 %v514, %v658
        %v723 = vadd.f32 %v515, %v659
        %v724 = vadd.f32 %v516, %v660
        %v725 = vadd.f32 %v517, %v661
        %v726 = vadd.f32 %v518, %v662
        %v727 = vadd.f32 %v519, %v663
        %v728 = vadd.f32 %v520, %v664
        %v729 = vadd.f32 %v521, %v665
        %v730 = vadd.f32 %v522, %v666
        %v731 = vadd.f32 %v523, %v667
        %v732 = vadd.f32 %v524, %v668
        %v733 = vadd.f32 %v525, %v669
        %v734 = vadd.f32 %v526, %v670
        %v735 = vadd.f32 %v527, %v671
        %v736 = vadd.f32 %v528, %v672
        %v737 = vadd.f32 %v529, %v673
        %v738 = vadd.f32 %v530, %v674
        %v739 = vadd.f32 %v531, %v675
        %v740 = vadd.f32 %v532, %v676
        %v741 = vadd.f32 %v533, %v677
        %v742 = vadd.f32 %v534, %v678
        %v743 = vadd.f32 %v535, %v679
        %v744 = vadd.f32 %v536, %v680
        %v745 = vadd.f32 %v537, %v681
        %v746 = vadd.f32 %v538, %v682
        %v747 = vadd.f32 %v539, %v683
        %v748 = vadd.f32 %v540, %v684
        %v749 = vadd.f32 %v541, %v685
        %v750 = vadd.f32 %v542, %v686
        %v751 = vadd.f32 %v543, %v687
        %v752 = vadd.f32 %v544, %v688
        %v753 = vadd.f32 %v545, %v689
        %v754 = vadd.f32 %v546, %v690
        %v755 = vadd.f32 %v547, %v691
        %v756 = vadd.f32 %v548, %v692
        %v757 = vadd.f32 %v549, %v693
        %v758 = vadd.f32 %v550, %v694
        %v759 = vadd.f32 %v551, %v695
        %v760 = vadd.f32 %v552, %v696
        %v761 = vadd.f32 %v553, %v697
        %v762 = vadd.f32 %v554, %v698
        %v763 = vadd.f32 %v555, %v699
        %v764 = vadd.f32 %v556, %v700
        %v765 = vadd.f32 %v557, %v701
        %v766 = vadd.f32 %v558, %v702
        %v767 = vadd.f32 %v559, %v703
        %v768 = vadd.f32 %v560, %v704
        %v769 = vadd.f32 %v561, %v705
        %v770 = vadd.f32 %v562, %v706
        %v771 = vadd.f32 %v563, %v707
        %v772 = vadd.f32 %v564, %v708
        %v773 = vlaneseq
        %v774 = vshrl.u32 %v773, 7
        %v775 = vsub.s32 0, %v774
        %v776 = vrot.slane %v370, %v775
        %v777 = vlaneseq
        %v778 = vshrl.u32 %v777, 7
        %v779 = vsub.s32 0, %v778
        %v780 = vrot.slane %v371, %v779
        %vm781 = vcmp.eq.s32.totalorder %v389, %v776
        %vm782 = vcmp.eq.s32.totalorder %v389, %v780
        %vm783 = vcmp.eq.s32.totalorder %v390, %v776
        %vm784 = vcmp.eq.s32.totalorder %v390, %v780
        %vm785 = vcmp.eq.s32.totalorder %v391, %v776
        %vm786 = vcmp.eq.s32.totalorder %v391, %v780
        %vm787 = vcmp.eq.s32.totalorder %v392, %v776
        %vm788 = vcmp.eq.s32.totalorder %v392, %v780
        %vm789 = vcmp.eq.s32.totalorder %v393, %v776
        %vm790 = vcmp.eq.s32.totalorder %v393, %v780
        %vm791 = vcmp.eq.s32.totalorder %v394, %v776
        %vm792 = vcmp.eq.s32.totalorder %v394, %v780
        %vm793 = vcmp.eq.s32.totalorder %v395, %v776
        %vm794 = vcmp.eq.s32.totalorder %v395, %v780
        %vm795 = vcmp.eq.s32.totalorder %v396, %v776
        %vm796 = vcmp.eq.s32.totalorder %v396, %v780
        %vm797 = vcmp.eq.s32.totalorder %v397, %v776
        %vm798 = vcmp.eq.s32.totalorder %v397, %v780
        %vm799 = vcmp.eq.s32.totalorder %v398, %v776
        %vm800 = vcmp.eq.s32.totalorder %v398, %v780
        %vm801 = vcmp.eq.s32.totalorder %v399, %v776
        %vm802 = vcmp.eq.s32.totalorder %v399, %v780
        %vm803 = vcmp.eq.s32.totalorder %v400, %v776
        %vm804 = vcmp.eq.s32.totalorder %v400, %v780
        %vm805 = vcmp.eq.s32.totalorder %v401, %v776
        %vm806 = vcmp.eq.s32.totalorder %v401, %v780
        %vm807 = vcmp.eq.s32.totalorder %v402, %v776
        %vm808 = vcmp.eq.s32.totalorder %v402, %v780
        %vm809 = vcmp.eq.s32.totalorder %v403, %v776
        %vm810 = vcmp.eq.s32.totalorder %v403, %v780
        %vm811 = vcmp.eq.s32.totalorder %v404, %v776
        %vm812 = vcmp.eq.s32.totalorder %v404, %v780
        %vm813 = vcmp.eq.s32.totalorder %v405, %v776
        %vm814 = vcmp.eq.s32.totalorder %v405, %v780
        %vm815 = vcmp.eq.s32.totalorder %v406, %v776
        %vm816 = vcmp.eq.s32.totalorder %v406, %v780
        %vm817 = vcmp.eq.s32.totalorder %v407, %v776
        %vm818 = vcmp.eq.s32.totalorder %v407, %v780
        %vm819 = vcmp.eq.s32.totalorder %v408, %v776
        %vm820 = vcmp.eq.s32.totalorder %v408, %v780
        %vm821 = vcmp.eq.s32.totalorder %v409, %v776
        %vm822 = vcmp.eq.s32.totalorder %v409, %v780
        %vm823 = vcmp.eq.s32.totalorder %v410, %v776
        %vm824 = vcmp.eq.s32.totalorder %v410, %v780
        %vm825 = vcmp.eq.s32.totalorder %v411, %v776
        %vm826 = vcmp.eq.s32.totalorder %v411, %v780
        %vm827 = vcmp.eq.s32.totalorder %v412, %v776
        %vm828 = vcmp.eq.s32.totalorder %v412, %v780
        %vm829 = vcmp.eq.s32.totalorder %v413, %v776
        %vm830 = vcmp.eq.s32.totalorder %v413, %v780
        %vm831 = vcmp.eq.s32.totalorder %v414, %v776
        %vm832 = vcmp.eq.s32.totalorder %v414, %v780
        %vm833 = vcmp.eq.s32.totalorder %v415, %v776
        %vm834 = vcmp.eq.s32.totalorder %v415, %v780
        %vm835 = vcmp.eq.s32.totalorder %v416, %v776
        %vm836 = vcmp.eq.s32.totalorder %v416, %v780
        %vm837 = vcmp.eq.s32.totalorder %v417, %v776
        %vm838 = vcmp.eq.s32.totalorder %v417, %v780
        %vm839 = vcmp.eq.s32.totalorder %v418, %v776
        %vm840 = vcmp.eq.s32.totalorder %v418, %v780
        %vm841 = vcmp.eq.s32.totalorder %v419, %v776
        %vm842 = vcmp.eq.s32.totalorder %v419, %v780
        %vm843 = vcmp.eq.s32.totalorder %v420, %v776
        %vm844 = vcmp.eq.s32.totalorder %v420, %v780
        %v845 = vlaneseq
        %v846 = vshrl.u32 %v845, 7
        %v847 = vsub.s32 0, %v846
        %v848 = vrot.slane %v384, %v847
        %v849 = vlaneseq
        %v850 = vshrl.u32 %v849, 7
        %v851 = vsub.s32 0, %v850
        %v852 = vrot.slane %v385, %v851
        %v853 = vsel %vm781, %v848, 0.0
        %v854 = vsel %vm782, %v852, 0.0
        %v855 = vsel %vm783, %v848, 0.0
        %v856 = vsel %vm784, %v852, 0.0
        %v857 = vsel %vm785, %v848, 0.0
        %v858 = vsel %vm786, %v852, 0.0
        %v859 = vsel %vm787, %v848, 0.0
        %v860 = vsel %vm788, %v852, 0.0
        %v861 = vsel %vm789, %v848, 0.0
        %v862 = vsel %vm790, %v852, 0.0
        %v863 = vsel %vm791, %v848, 0.0
        %v864 = vsel %vm792, %v852, 0.0
        %v865 = vsel %vm793, %v848, 0.0
        %v866 = vsel %vm794, %v852, 0.0
        %v867 = vsel %vm795, %v848, 0.0
        %v868 = vsel %vm796, %v852, 0.0
        %v869 = vsel %vm797, %v848, 0.0
        %v870 = vsel %vm798, %v852, 0.0
        %v871 = vsel %vm799, %v848, 0.0
        %v872 = vsel %vm800, %v852, 0.0
        %v873 = vsel %vm801, %v848, 0.0
        %v874 = vsel %vm802, %v852, 0.0
        %v875 = vsel %vm803, %v848, 0.0
        %v876 = vsel %vm804, %v852, 0.0
        %v877 = vsel %vm805, %v848, 0.0
        %v878 = vsel %vm806, %v852, 0.0
        %v879 = vsel %vm807, %v848, 0.0
        %v880 = vsel %vm808, %v852, 0.0
        %v881 = vsel %vm809, %v848, 0.0
        %v882 = vsel %vm810, %v852, 0.0
        %v883 = vsel %vm811, %v848, 0.0
        %v884 = vsel %vm812, %v852, 0.0
        %v885 = vsel %vm813, %v848, 0.0
        %v886 = vsel %vm814, %v852, 0.0
        %v887 = vsel %vm815, %v848, 0.0
        %v888 = vsel %vm816, %v852, 0.0
        %v889 = vsel %vm817, %v848, 0.0
        %v890 = vsel %vm818, %v852, 0.0
        %v891 = vsel %vm819, %v848, 0.0
        %v892 = vsel %vm820, %v852, 0.0
        %v893 = vsel %vm821, %v848, 0.0
        %v894 = vsel %vm822, %v852, 0.0
        %v895 = vsel %vm823, %v848, 0.0
        %v896 = vsel %vm824, %v852, 0.0
        %v897 = vsel %vm825, %v848, 0.0
        %v898 = vsel %vm826, %v852, 0.0
        %v899 = vsel %vm827, %v848, 0.0
        %v900 = vsel %vm828, %v852, 0.0
        %v901 = vsel %vm829, %v848, 0.0
        %v902 = vsel %vm830, %v852, 0.0
        %v903 = vsel %vm831, %v848, 0.0
        %v904 = vsel %vm832, %v852, 0.0
        %v905 = vsel %vm833, %v848, 0.0
        %v906 = vsel %vm834, %v852, 0.0
        %v907 = vsel %vm835, %v848, 0.0
        %v908 = vsel %vm836, %v852, 0.0
        %v909 = vsel %vm837, %v848, 0.0
        %v910 = vsel %vm838, %v852, 0.0
        %v911 = vsel %vm839, %v848, 0.0
        %v912 = vsel %vm840, %v852, 0.0
        %v913 = vsel %vm841, %v848, 0.0
        %v914 = vsel %vm842, %v852, 0.0
        %v915 = vsel %vm843, %v848, 0.0
        %v916 = vsel %vm844, %v852, 0.0
        %v917 = vadd.f32 %v709, %v853
        %v918 = vadd.f32 %v710, %v854
        %v919 = vadd.f32 %v711, %v855
        %v920 = vadd.f32 %v712, %v856
        %v921 = vadd.f32 %v713, %v857
        %v922 = vadd.f32 %v714, %v858
        %v923 = vadd.f32 %v715, %v859
        %v924 = vadd.f32 %v716, %v860
        %v925 = vadd.f32 %v717, %v861
        %v926 = vadd.f32 %v718, %v862
        %v927 = vadd.f32 %v719, %v863
        %v928 = vadd.f32 %v720, %v864
        %v929 = vadd.f32 %v721, %v865
        %v930 = vadd.f32 %v722, %v866
        %v931 = vadd.f32 %v723, %v867
        %v932 = vadd.f32 %v724, %v868
        %v933 = vadd.f32 %v725, %v869
        %v934 = vadd.f32 %v726, %v870
        %v935 = vadd.f32 %v727, %v871
        %v936 = vadd.f32 %v728, %v872
        %v937 = vadd.f32 %v729, %v873
        %v938 = vadd.f32 %v730, %v874
        %v939 = vadd.f32 %v731, %v875
        %v940 = vadd.f32 %v732, %v876
        %v941 = vadd.f32 %v733, %v877
        %v942 = vadd.f32 %v734, %v878
        %v943 = vadd.f32 %v735, %v879
        %v944 = vadd.f32 %v736, %v880
        %v945 = vadd.f32 %v737, %v881
        %v946 = vadd.f32 %v738, %v882
        %v947 = vadd.f32 %v739, %v883
        %v948 = vadd.f32 %v740, %v884
        %v949 = vadd.f32 %v741, %v885
        %v950 = vadd.f32 %v742, %v886
        %v951 = vadd.f32 %v743, %v887
        %v952 = vadd.f32 %v744, %v888
        %v953 = vadd.f32 %v745, %v889
        %v954 = vadd.f32 %v746, %v890
        %v955 = vadd.f32 %v747, %v891
        %v956 = vadd.f32 %v748, %v892
        %v957 = vadd.f32 %v749, %v893
        %v958 = vadd.f32 %v750, %v894
        %v959 = vadd.f32 %v751, %v895
        %v960 = vadd.f32 %v752, %v896
        %v961 = vadd.f32 %v753, %v897
        %v962 = vadd.f32 %v754, %v898
        %v963 = vadd.f32 %v755, %v899
        %v964 = vadd.f32 %v756, %v900
        %v965 = vadd.f32 %v757, %v901
        %v966 = vadd.f32 %v758, %v902
        %v967 = vadd.f32 %v759, %v903
        %v968 = vadd.f32 %v760, %v904
        %v969 = vadd.f32 %v761, %v905
        %v970 = vadd.f32 %v762, %v906
        %v971 = vadd.f32 %v763, %v907
        %v972 = vadd.f32 %v764, %v908
        %v973 = vadd.f32 %v765, %v909
        %v974 = vadd.f32 %v766, %v910
        %v975 = vadd.f32 %v767, %v911
        %v976 = vadd.f32 %v768, %v912
        %v977 = vadd.f32 %v769, %v913
        %v978 = vadd.f32 %v770, %v914
        %v979 = vadd.f32 %v771, %v915
        %v980 = vadd.f32 %v772, %v916
        %v981 = vlaneseq
        %v982 = vshrl.u32 %v981, 7
        %v983 = vsub.s32 0, %v982
        %v984 = vrot.slane %v374, %v983
        %v985 = vlaneseq
        %v986 = vshrl.u32 %v985, 7
        %v987 = vsub.s32 0, %v986
        %v988 = vrot.slane %v375, %v987
        %vm989 = vcmp.eq.s32.totalorder %v389, %v984
        %vm990 = vcmp.eq.s32.totalorder %v389, %v988
        %vm991 = vcmp.eq.s32.totalorder %v390, %v984
        %vm992 = vcmp.eq.s32.totalorder %v390, %v988
        %vm993 = vcmp.eq.s32.totalorder %v391, %v984
        %vm994 = vcmp.eq.s32.totalorder %v391, %v988
        %vm995 = vcmp.eq.s32.totalorder %v392, %v984
        %vm996 = vcmp.eq.s32.totalorder %v392, %v988
        %vm997 = vcmp.eq.s32.totalorder %v393, %v984
        %vm998 = vcmp.eq.s32.totalorder %v393, %v988
        %vm999 = vcmp.eq.s32.totalorder %v394, %v984
        %vm1000 = vcmp.eq.s32.totalorder %v394, %v988
        %vm1001 = vcmp.eq.s32.totalorder %v395, %v984
        %vm1002 = vcmp.eq.s32.totalorder %v395, %v988
        %vm1003 = vcmp.eq.s32.totalorder %v396, %v984
        %vm1004 = vcmp.eq.s32.totalorder %v396, %v988
        %vm1005 = vcmp.eq.s32.totalorder %v397, %v984
        %vm1006 = vcmp.eq.s32.totalorder %v397, %v988
        %vm1007 = vcmp.eq.s32.totalorder %v398, %v984
        %vm1008 = vcmp.eq.s32.totalorder %v398, %v988
        %vm1009 = vcmp.eq.s32.totalorder %v399, %v984
        %vm1010 = vcmp.eq.s32.totalorder %v399, %v988
        %vm1011 = vcmp.eq.s32.totalorder %v400, %v984
        %vm1012 = vcmp.eq.s32.totalorder %v400, %v988
        %vm1013 = vcmp.eq.s32.totalorder %v401, %v984
        %vm1014 = vcmp.eq.s32.totalorder %v401, %v988
        %vm1015 = vcmp.eq.s32.totalorder %v402, %v984
        %vm1016 = vcmp.eq.s32.totalorder %v402, %v988
        %vm1017 = vcmp.eq.s32.totalorder %v403, %v984
        %vm1018 = vcmp.eq.s32.totalorder %v403, %v988
        %vm1019 = vcmp.eq.s32.totalorder %v404, %v984
        %vm1020 = vcmp.eq.s32.totalorder %v404, %v988
        %vm1021 = vcmp.eq.s32.totalorder %v405, %v984
        %vm1022 = vcmp.eq.s32.totalorder %v405, %v988
        %vm1023 = vcmp.eq.s32.totalorder %v406, %v984
        %vm1024 = vcmp.eq.s32.totalorder %v406, %v988
        %vm1025 = vcmp.eq.s32.totalorder %v407, %v984
        %vm1026 = vcmp.eq.s32.totalorder %v407, %v988
        %vm1027 = vcmp.eq.s32.totalorder %v408, %v984
        %vm1028 = vcmp.eq.s32.totalorder %v408, %v988
        %vm1029 = vcmp.eq.s32.totalorder %v409, %v984
        %vm1030 = vcmp.eq.s32.totalorder %v409, %v988
        %vm1031 = vcmp.eq.s32.totalorder %v410, %v984
        %vm1032 = vcmp.eq.s32.totalorder %v410, %v988
        %vm1033 = vcmp.eq.s32.totalorder %v411, %v984
        %vm1034 = vcmp.eq.s32.totalorder %v411, %v988
        %vm1035 = vcmp.eq.s32.totalorder %v412, %v984
        %vm1036 = vcmp.eq.s32.totalorder %v412, %v988
        %vm1037 = vcmp.eq.s32.totalorder %v413, %v984
        %vm1038 = vcmp.eq.s32.totalorder %v413, %v988
        %vm1039 = vcmp.eq.s32.totalorder %v414, %v984
        %vm1040 = vcmp.eq.s32.totalorder %v414, %v988
        %vm1041 = vcmp.eq.s32.totalorder %v415, %v984
        %vm1042 = vcmp.eq.s32.totalorder %v415, %v988
        %vm1043 = vcmp.eq.s32.totalorder %v416, %v984
        %vm1044 = vcmp.eq.s32.totalorder %v416, %v988
        %vm1045 = vcmp.eq.s32.totalorder %v417, %v984
        %vm1046 = vcmp.eq.s32.totalorder %v417, %v988
        %vm1047 = vcmp.eq.s32.totalorder %v418, %v984
        %vm1048 = vcmp.eq.s32.totalorder %v418, %v988
        %vm1049 = vcmp.eq.s32.totalorder %v419, %v984
        %vm1050 = vcmp.eq.s32.totalorder %v419, %v988
        %vm1051 = vcmp.eq.s32.totalorder %v420, %v984
        %vm1052 = vcmp.eq.s32.totalorder %v420, %v988
        %v1053 = vlaneseq
        %v1054 = vshrl.u32 %v1053, 7
        %v1055 = vsub.s32 0, %v1054
        %v1056 = vrot.slane %v386, %v1055
        %v1057 = vlaneseq
        %v1058 = vshrl.u32 %v1057, 7
        %v1059 = vsub.s32 0, %v1058
        %v1060 = vrot.slane %v387, %v1059
        %v1061 = vsel %vm989, %v1056, 0.0
        %v1062 = vsel %vm990, %v1060, 0.0
        %v1063 = vsel %vm991, %v1056, 0.0
        %v1064 = vsel %vm992, %v1060, 0.0
        %v1065 = vsel %vm993, %v1056, 0.0
        %v1066 = vsel %vm994, %v1060, 0.0
        %v1067 = vsel %vm995, %v1056, 0.0
        %v1068 = vsel %vm996, %v1060, 0.0
        %v1069 = vsel %vm997, %v1056, 0.0
        %v1070 = vsel %vm998, %v1060, 0.0
        %v1071 = vsel %vm999, %v1056, 0.0
        %v1072 = vsel %vm1000, %v1060, 0.0
        %v1073 = vsel %vm1001, %v1056, 0.0
        %v1074 = vsel %vm1002, %v1060, 0.0
        %v1075 = vsel %vm1003, %v1056, 0.0
        %v1076 = vsel %vm1004, %v1060, 0.0
        %v1077 = vsel %vm1005, %v1056, 0.0
        %v1078 = vsel %vm1006, %v1060, 0.0
        %v1079 = vsel %vm1007, %v1056, 0.0
        %v1080 = vsel %vm1008, %v1060, 0.0
        %v1081 = vsel %vm1009, %v1056, 0.0
        %v1082 = vsel %vm1010, %v1060, 0.0
        %v1083 = vsel %vm1011, %v1056, 0.0
        %v1084 = vsel %vm1012, %v1060, 0.0
        %v1085 = vsel %vm1013, %v1056, 0.0
        %v1086 = vsel %vm1014, %v1060, 0.0
        %v1087 = vsel %vm1015, %v1056, 0.0
        %v1088 = vsel %vm1016, %v1060, 0.0
        %v1089 = vsel %vm1017, %v1056, 0.0
        %v1090 = vsel %vm1018, %v1060, 0.0
        %v1091 = vsel %vm1019, %v1056, 0.0
        %v1092 = vsel %vm1020, %v1060, 0.0
        %v1093 = vsel %vm1021, %v1056, 0.0
        %v1094 = vsel %vm1022, %v1060, 0.0
        %v1095 = vsel %vm1023, %v1056, 0.0
        %v1096 = vsel %vm1024, %v1060, 0.0
        %v1097 = vsel %vm1025, %v1056, 0.0
        %v1098 = vsel %vm1026, %v1060, 0.0
        %v1099 = vsel %vm1027, %v1056, 0.0
        %v1100 = vsel %vm1028, %v1060, 0.0
        %v1101 = vsel %vm1029, %v1056, 0.0
        %v1102 = vsel %vm1030, %v1060, 0.0
        %v1103 = vsel %vm1031, %v1056, 0.0
        %v1104 = vsel %vm1032, %v1060, 0.0
        %v1105 = vsel %vm1033, %v1056, 0.0
        %v1106 = vsel %vm1034, %v1060, 0.0
        %v1107 = vsel %vm1035, %v1056, 0.0
        %v1108 = vsel %vm1036, %v1060, 0.0
        %v1109 = vsel %vm1037, %v1056, 0.0
        %v1110 = vsel %vm1038, %v1060, 0.0
        %v1111 = vsel %vm1039, %v1056, 0.0
        %v1112 = vsel %vm1040, %v1060, 0.0
        %v1113 = vsel %vm1041, %v1056, 0.0
        %v1114 = vsel %vm1042, %v1060, 0.0
        %v1115 = vsel %vm1043, %v1056, 0.0
        %v1116 = vsel %vm1044, %v1060, 0.0
        %v1117 = vsel %vm1045, %v1056, 0.0
        %v1118 = vsel %vm1046, %v1060, 0.0
        %v1119 = vsel %vm1047, %v1056, 0.0
        %v1120 = vsel %vm1048, %v1060, 0.0
        %v1121 = vsel %vm1049, %v1056, 0.0
        %v1122 = vsel %vm1050, %v1060, 0.0
        %v1123 = vsel %vm1051, %v1056, 0.0
        %v1124 = vsel %vm1052, %v1060, 0.0
        %v1125 = vadd.f32 %v917, %v1061
        %v1126 = vadd.f32 %v918, %v1062
        %v1127 = vadd.f32 %v919, %v1063
        %v1128 = vadd.f32 %v920, %v1064
        %v1129 = vadd.f32 %v921, %v1065
        %v1130 = vadd.f32 %v922, %v1066
        %v1131 = vadd.f32 %v923, %v1067
        %v1132 = vadd.f32 %v924, %v1068
        %v1133 = vadd.f32 %v925, %v1069
        %v1134 = vadd.f32 %v926, %v1070
        %v1135 = vadd.f32 %v927, %v1071
        %v1136 = vadd.f32 %v928, %v1072
        %v1137 = vadd.f32 %v929, %v1073
        %v1138 = vadd.f32 %v930, %v1074
        %v1139 = vadd.f32 %v931, %v1075
        %v1140 = vadd.f32 %v932, %v1076
        %v1141 = vadd.f32 %v933, %v1077
        %v1142 = vadd.f32 %v934, %v1078
        %v1143 = vadd.f32 %v935, %v1079
        %v1144 = vadd.f32 %v936, %v1080
        %v1145 = vadd.f32 %v937, %v1081
        %v1146 = vadd.f32 %v938, %v1082
        %v1147 = vadd.f32 %v939, %v1083
        %v1148 = vadd.f32 %v940, %v1084
        %v1149 = vadd.f32 %v941, %v1085
        %v1150 = vadd.f32 %v942, %v1086
        %v1151 = vadd.f32 %v943, %v1087
        %v1152 = vadd.f32 %v944, %v1088
        %v1153 = vadd.f32 %v945, %v1089
        %v1154 = vadd.f32 %v946, %v1090
        %v1155 = vadd.f32 %v947, %v1091
        %v1156 = vadd.f32 %v948, %v1092
        %v1157 = vadd.f32 %v949, %v1093
        %v1158 = vadd.f32 %v950, %v1094
        %v1159 = vadd.f32 %v951, %v1095
        %v1160 = vadd.f32 %v952, %v1096
        %v1161 = vadd.f32 %v953, %v1097
        %v1162 = vadd.f32 %v954, %v1098
        %v1163 = vadd.f32 %v955, %v1099
        %v1164 = vadd.f32 %v956, %v1100
        %v1165 = vadd.f32 %v957, %v1101
        %v1166 = vadd.f32 %v958, %v1102
        %v1167 = vadd.f32 %v959, %v1103
        %v1168 = vadd.f32 %v960, %v1104
        %v1169 = vadd.f32 %v961, %v1105
        %v1170 = vadd.f32 %v962, %v1106
        %v1171 = vadd.f32 %v963, %v1107
        %v1172 = vadd.f32 %v964, %v1108
        %v1173 = vadd.f32 %v965, %v1109
        %v1174 = vadd.f32 %v966, %v1110
        %v1175 = vadd.f32 %v967, %v1111
        %v1176 = vadd.f32 %v968, %v1112
        %v1177 = vadd.f32 %v969, %v1113
        %v1178 = vadd.f32 %v970, %v1114
        %v1179 = vadd.f32 %v971, %v1115
        %v1180 = vadd.f32 %v972, %v1116
        %v1181 = vadd.f32 %v973, %v1117
        %v1182 = vadd.f32 %v974, %v1118
        %v1183 = vadd.f32 %v975, %v1119
        %v1184 = vadd.f32 %v976, %v1120
        %v1185 = vadd.f32 %v977, %v1121
        %v1186 = vadd.f32 %v978, %v1122
        %v1187 = vadd.f32 %v979, %v1123
        %v1188 = vadd.f32 %v980, %v1124
        %v1189 = vld [vmem:[%s254] sm:$0x77]
        %v1191 = vcombine.high %v1189, %v1189
        %v1193 = vand.u32 %v1126, 4294901760
        %1194 = vmatprep.subr.mxu0 %v1193
        %v1195 = vand.u32 %v1125, 4294901760
        %1196 = vmatpush1.msra.mxu0 %v1195
        %v1197 = vand.u32 %v1128, 4294901760
        %1198 = vmatprep.subr.mxu0 %v1197
        %v1199 = vand.u32 %v1127, 4294901760
        %1200 = vmatpush1.msra.mxu0 %v1199
        %v1201 = vand.u32 %v1130, 4294901760
        %1202 = vmatprep.subr.mxu0 %v1201
        %v1203 = vand.u32 %v1129, 4294901760
        %1204 = vmatpush1.msra.mxu0 %v1203
        %v1205 = vand.u32 %v1132, 4294901760
        %1206 = vmatprep.subr.mxu0 %v1205
        %v1207 = vand.u32 %v1131, 4294901760
        %1208 = vmatpush1.msra.mxu0 %v1207
        %v1209 = vand.u32 %v1134, 4294901760
        %1210 = vmatprep.subr.mxu0 %v1209
        %v1211 = vand.u32 %v1133, 4294901760
        %1212 = vmatpush1.msra.mxu0 %v1211
        %v1213 = vand.u32 %v1136, 4294901760
        %1214 = vmatprep.subr.mxu0 %v1213
        %v1215 = vand.u32 %v1135, 4294901760
        %1216 = vmatpush1.msra.mxu0 %v1215
        %v1217 = vand.u32 %v1138, 4294901760
        %1218 = vmatprep.subr.mxu0 %v1217
        %v1219 = vand.u32 %v1137, 4294901760
        %1220 = vmatpush1.msra.mxu0 %v1219
        %v1221 = vand.u32 %v1140, 4294901760
        %1222 = vmatprep.subr.mxu0 %v1221
        %v1223 = vand.u32 %v1139, 4294901760
        %1224 = vmatpush1.msra.mxu0 %v1223
        %v1225 = vand.u32 %v1142, 4294901760
        %1226 = vmatprep.subr.mxu0 %v1225
        %v1227 = vand.u32 %v1141, 4294901760
        %1228 = vmatpush1.msra.mxu0 %v1227
        %v1229 = vand.u32 %v1144, 4294901760
        %1230 = vmatprep.subr.mxu0 %v1229
        %v1231 = vand.u32 %v1143, 4294901760
        %1232 = vmatpush1.msra.mxu0 %v1231
        %v1233 = vand.u32 %v1146, 4294901760
        %1234 = vmatprep.subr.mxu0 %v1233
        %v1235 = vand.u32 %v1145, 4294901760
        %1236 = vmatpush1.msra.mxu0 %v1235
        %v1237 = vand.u32 %v1148, 4294901760
        %1238 = vmatprep.subr.mxu0 %v1237
        %v1239 = vand.u32 %v1147, 4294901760
        %1240 = vmatpush1.msra.mxu0 %v1239
        %v1241 = vand.u32 %v1150, 4294901760
        %1242 = vmatprep.subr.mxu0 %v1241
        %v1243 = vand.u32 %v1149, 4294901760
        %1244 = vmatpush1.msra.mxu0 %v1243
        %v1245 = vand.u32 %v1152, 4294901760
        %1246 = vmatprep.subr.mxu0 %v1245
        %v1247 = vand.u32 %v1151, 4294901760
        %1248 = vmatpush1.msra.mxu0 %v1247
        %v1249 = vand.u32 %v1154, 4294901760
        %1250 = vmatprep.subr.mxu0 %v1249
        %v1251 = vand.u32 %v1153, 4294901760
        %1252 = vmatpush1.msra.mxu0 %v1251
        %v1253 = vand.u32 %v1156, 4294901760
        %1254 = vmatprep.subr.mxu0 %v1253
        %v1255 = vand.u32 %v1155, 4294901760
        %1256 = vmatpush1.msra.mxu0 %v1255
        %v1257 = vand.u32 %v1158, 4294901760
        %1258 = vmatprep.subr.mxu0 %v1257
        %v1259 = vand.u32 %v1157, 4294901760
        %1260 = vmatpush1.msra.mxu0 %v1259
        %v1261 = vand.u32 %v1160, 4294901760
        %1262 = vmatprep.subr.mxu0 %v1261
        %v1263 = vand.u32 %v1159, 4294901760
        %1264 = vmatpush1.msra.mxu0 %v1263
        %v1265 = vand.u32 %v1162, 4294901760
        %1266 = vmatprep.subr.mxu0 %v1265
        %v1267 = vand.u32 %v1161, 4294901760
        %1268 = vmatpush1.msra.mxu0 %v1267
        %v1269 = vand.u32 %v1164, 4294901760
        %1270 = vmatprep.subr.mxu0 %v1269
        %v1271 = vand.u32 %v1163, 4294901760
        %1272 = vmatpush1.msra.mxu0 %v1271
        %v1273 = vand.u32 %v1166, 4294901760
        %1274 = vmatprep.subr.mxu0 %v1273
        %v1275 = vand.u32 %v1165, 4294901760
        %1276 = vmatpush1.msra.mxu0 %v1275
        %v1277 = vand.u32 %v1168, 4294901760
        %1278 = vmatprep.subr.mxu0 %v1277
        %v1279 = vand.u32 %v1167, 4294901760
        %1280 = vmatpush1.msra.mxu0 %v1279
        %v1281 = vand.u32 %v1170, 4294901760
        %1282 = vmatprep.subr.mxu0 %v1281
        %v1283 = vand.u32 %v1169, 4294901760
        %1284 = vmatpush1.msra.mxu0 %v1283
        %v1285 = vand.u32 %v1172, 4294901760
        %1286 = vmatprep.subr.mxu0 %v1285
        %v1287 = vand.u32 %v1171, 4294901760
        %1288 = vmatpush1.msra.mxu0 %v1287
        %v1289 = vand.u32 %v1174, 4294901760
        %1290 = vmatprep.subr.mxu0 %v1289
        %v1291 = vand.u32 %v1173, 4294901760
        %1292 = vmatpush1.msra.mxu0 %v1291
        %v1293 = vand.u32 %v1176, 4294901760
        %1294 = vmatprep.subr.mxu0 %v1293
        %v1295 = vand.u32 %v1175, 4294901760
        %1296 = vmatpush1.msra.mxu0 %v1295
        %v1297 = vand.u32 %v1178, 4294901760
        %1298 = vmatprep.subr.mxu0 %v1297
        %v1299 = vand.u32 %v1177, 4294901760
        %1300 = vmatpush1.msra.mxu0 %v1299
        %v1301 = vand.u32 %v1180, 4294901760
        %1302 = vmatprep.subr.mxu0 %v1301
        %v1303 = vand.u32 %v1179, 4294901760
        %1304 = vmatpush1.msra.mxu0 %v1303
        %v1305 = vand.u32 %v1182, 4294901760
        %1306 = vmatprep.subr.mxu0 %v1305
        %v1307 = vand.u32 %v1181, 4294901760
        %1308 = vmatpush1.msra.mxu0 %v1307
        %v1309 = vand.u32 %v1184, 4294901760
        %1310 = vmatprep.subr.mxu0 %v1309
        %v1311 = vand.u32 %v1183, 4294901760
        %1312 = vmatpush1.msra.mxu0 %v1311
        %v1313 = vand.u32 %v1186, 4294901760
        %1314 = vmatprep.subr.mxu0 %v1313
        %v1315 = vand.u32 %v1185, 4294901760
        %1316 = vmatpush1.msra.mxu0 %v1315
        %v1317 = vand.u32 %v1188, 4294901760
        %1318 = vmatprep.subr.mxu0 %v1317
        %v1319 = vand.u32 %v1187, 4294901760
        %1320 = vmatpush1.msra.mxu0 %v1319
        %v1321 = vand.u32 %v1191, 4294901760
        %v1322 = vsub.f32 %v1191, %v1321
        %v1323 = vand.u32 %v1322, 4294901760
        %v1324 = vsub.f32 %v1322, %v1323
        %v1325 = vand.u32 %v1324, 4294901760
        %1326 = vmatprep.mubr.f32.mxu0 %v1325
        %v1327 = vand.u32 %v1189, 4294901760
        %v1328 = vsub.f32 %v1189, %v1327
        %v1329 = vand.u32 %v1328, 4294901760
        %v1330 = vsub.f32 %v1328, %v1329
        %v1331 = vand.u32 %v1330, 4294901760
        %1332 = vmatmul.mubr.f32.gmra.mrb[0].mxu0 %v1331
        %v1333 = vpop.f32.mrb[0].mxu0
        %v1334 = vadd.f32 0.0, %v1333
        %v1335 = vpop.f32.mrb[0].mxu0
        %v1336 = vadd.f32 0.0, %v1335
        %1337 = vdwg.mxu0
        %v1338 = vand.u32 %v1126, 4294901760
        %v1339 = vsub.f32 %v1126, %v1338
        %v1340 = vand.u32 %v1339, 4294901760
        %v1341 = vsub.f32 %v1339, %v1340
        %v1342 = vand.u32 %v1341, 4294901760
        %1343 = vmatprep.subr.mxu0 %v1342
        %v1344 = vand.u32 %v1125, 4294901760
        %v1345 = vsub.f32 %v1125, %v1344
        %v1346 = vand.u32 %v1345, 4294901760
        %v1347 = vsub.f32 %v1345, %v1346
        %v1348 = vand.u32 %v1347, 4294901760
        %1349 = vmatpush1.msra.mxu0 %v1348
        %v1350 = vand.u32 %v1128, 4294901760
        %v1351 = vsub.f32 %v1128, %v1350
        %v1352 = vand.u32 %v1351, 4294901760
        %v1353 = vsub.f32 %v1351, %v1352
        %v1354 = vand.u32 %v1353, 4294901760
        %1355 = vmatprep.subr.mxu0 %v1354
        %v1356 = vand.u32 %v1127, 4294901760
        %v1357 = vsub.f32 %v1127, %v1356
        %v1358 = vand.u32 %v1357, 4294901760
        %v1359 = vsub.f32 %v1357, %v1358
        %v1360 = vand.u32 %v1359, 4294901760
        %1361 = vmatpush1.msra.mxu0 %v1360
        %v1362 = vand.u32 %v1130, 4294901760
        %v1363 = vsub.f32 %v1130, %v1362
        %v1364 = vand.u32 %v1363, 4294901760
        %v1365 = vsub.f32 %v1363, %v1364
        %v1366 = vand.u32 %v1365, 4294901760
        %1367 = vmatprep.subr.mxu0 %v1366
        %v1368 = vand.u32 %v1129, 4294901760
        %v1369 = vsub.f32 %v1129, %v1368
        %v1370 = vand.u32 %v1369, 4294901760
        %v1371 = vsub.f32 %v1369, %v1370
        %v1372 = vand.u32 %v1371, 4294901760
        %1373 = vmatpush1.msra.mxu0 %v1372
        %v1374 = vand.u32 %v1132, 4294901760
        %v1375 = vsub.f32 %v1132, %v1374
        %v1376 = vand.u32 %v1375, 4294901760
        %v1377 = vsub.f32 %v1375, %v1376
        %v1378 = vand.u32 %v1377, 4294901760
        %1379 = vmatprep.subr.mxu0 %v1378
        %v1380 = vand.u32 %v1131, 4294901760
        %v1381 = vsub.f32 %v1131, %v1380
        %v1382 = vand.u32 %v1381, 4294901760
        %v1383 = vsub.f32 %v1381, %v1382
        %v1384 = vand.u32 %v1383, 4294901760
        %1385 = vmatpush1.msra.mxu0 %v1384
        %v1386 = vand.u32 %v1134, 4294901760
        %v1387 = vsub.f32 %v1134, %v1386
        %v1388 = vand.u32 %v1387, 4294901760
        %v1389 = vsub.f32 %v1387, %v1388
        %v1390 = vand.u32 %v1389, 4294901760
        %1391 = vmatprep.subr.mxu0 %v1390
        %v1392 = vand.u32 %v1133, 4294901760
        %v1393 = vsub.f32 %v1133, %v1392
        %v1394 = vand.u32 %v1393, 4294901760
        %v1395 = vsub.f32 %v1393, %v1394
        %v1396 = vand.u32 %v1395, 4294901760
        %1397 = vmatpush1.msra.mxu0 %v1396
        %v1398 = vand.u32 %v1136, 4294901760
        %v1399 = vsub.f32 %v1136, %v1398
        %v1400 = vand.u32 %v1399, 4294901760
        %v1401 = vsub.f32 %v1399, %v1400
        %v1402 = vand.u32 %v1401, 4294901760
        %1403 = vmatprep.subr.mxu0 %v1402
        %v1404 = vand.u32 %v1135, 4294901760
        %v1405 = vsub.f32 %v1135, %v1404
        %v1406 = vand.u32 %v1405, 4294901760
        %v1407 = vsub.f32 %v1405, %v1406
        %v1408 = vand.u32 %v1407, 4294901760
        %1409 = vmatpush1.msra.mxu0 %v1408
        %v1410 = vand.u32 %v1138, 4294901760
        %v1411 = vsub.f32 %v1138, %v1410
        %v1412 = vand.u32 %v1411, 4294901760
        %v1413 = vsub.f32 %v1411, %v1412
        %v1414 = vand.u32 %v1413, 4294901760
        %1415 = vmatprep.subr.mxu0 %v1414
        %v1416 = vand.u32 %v1137, 4294901760
        %v1417 = vsub.f32 %v1137, %v1416
        %v1418 = vand.u32 %v1417, 4294901760
        %v1419 = vsub.f32 %v1417, %v1418
        %v1420 = vand.u32 %v1419, 4294901760
        %1421 = vmatpush1.msra.mxu0 %v1420
        %v1422 = vand.u32 %v1140, 4294901760
        %v1423 = vsub.f32 %v1140, %v1422
        %v1424 = vand.u32 %v1423, 4294901760
        %v1425 = vsub.f32 %v1423, %v1424
        %v1426 = vand.u32 %v1425, 4294901760
        %1427 = vmatprep.subr.mxu0 %v1426
        %v1428 = vand.u32 %v1139, 4294901760
        %v1429 = vsub.f32 %v1139, %v1428
        %v1430 = vand.u32 %v1429, 4294901760
        %v1431 = vsub.f32 %v1429, %v1430
        %v1432 = vand.u32 %v1431, 4294901760
        %1433 = vmatpush1.msra.mxu0 %v1432
        %v1434 = vand.u32 %v1142, 4294901760
        %v1435 = vsub.f32 %v1142, %v1434
        %v1436 = vand.u32 %v1435, 4294901760
        %v1437 = vsub.f32 %v1435, %v1436
        %v1438 = vand.u32 %v1437, 4294901760
        %1439 = vmatprep.subr.mxu0 %v1438
        %v1440 = vand.u32 %v1141, 4294901760
        %v1441 = vsub.f32 %v1141, %v1440
        %v1442 = vand.u32 %v1441, 4294901760
        %v1443 = vsub.f32 %v1441, %v1442
        %v1444 = vand.u32 %v1443, 4294901760
        %1445 = vmatpush1.msra.mxu0 %v1444
        %v1446 = vand.u32 %v1144, 4294901760
        %v1447 = vsub.f32 %v1144, %v1446
        %v1448 = vand.u32 %v1447, 4294901760
        %v1449 = vsub.f32 %v1447, %v1448
        %v1450 = vand.u32 %v1449, 4294901760
        %1451 = vmatprep.subr.mxu0 %v1450
        %v1452 = vand.u32 %v1143, 4294901760
        %v1453 = vsub.f32 %v1143, %v1452
        %v1454 = vand.u32 %v1453, 4294901760
        %v1455 = vsub.f32 %v1453, %v1454
        %v1456 = vand.u32 %v1455, 4294901760
        %1457 = vmatpush1.msra.mxu0 %v1456
        %v1458 = vand.u32 %v1146, 4294901760
        %v1459 = vsub.f32 %v1146, %v1458
        %v1460 = vand.u32 %v1459, 4294901760
        %v1461 = vsub.f32 %v1459, %v1460
        %v1462 = vand.u32 %v1461, 4294901760
        %1463 = vmatprep.subr.mxu0 %v1462
        %v1464 = vand.u32 %v1145, 4294901760
        %v1465 = vsub.f32 %v1145, %v1464
        %v1466 = vand.u32 %v1465, 4294901760
        %v1467 = vsub.f32 %v1465, %v1466
        %v1468 = vand.u32 %v1467, 4294901760
        %1469 = vmatpush1.msra.mxu0 %v1468
        %v1470 = vand.u32 %v1148, 4294901760
        %v1471 = vsub.f32 %v1148, %v1470
        %v1472 = vand.u32 %v1471, 4294901760
        %v1473 = vsub.f32 %v1471, %v1472
        %v1474 = vand.u32 %v1473, 4294901760
        %1475 = vmatprep.subr.mxu0 %v1474
        %v1476 = vand.u32 %v1147, 4294901760
        %v1477 = vsub.f32 %v1147, %v1476
        %v1478 = vand.u32 %v1477, 4294901760
        %v1479 = vsub.f32 %v1477, %v1478
        %v1480 = vand.u32 %v1479, 4294901760
        %1481 = vmatpush1.msra.mxu0 %v1480
        %v1482 = vand.u32 %v1150, 4294901760
        %v1483 = vsub.f32 %v1150, %v1482
        %v1484 = vand.u32 %v1483, 4294901760
        %v1485 = vsub.f32 %v1483, %v1484
        %v1486 = vand.u32 %v1485, 4294901760
        %1487 = vmatprep.subr.mxu0 %v1486
        %v1488 = vand.u32 %v1149, 4294901760
        %v1489 = vsub.f32 %v1149, %v1488
        %v1490 = vand.u32 %v1489, 4294901760
        %v1491 = vsub.f32 %v1489, %v1490
        %v1492 = vand.u32 %v1491, 4294901760
        %1493 = vmatpush1.msra.mxu0 %v1492
        %v1494 = vand.u32 %v1152, 4294901760
        %v1495 = vsub.f32 %v1152, %v1494
        %v1496 = vand.u32 %v1495, 4294901760
        %v1497 = vsub.f32 %v1495, %v1496
        %v1498 = vand.u32 %v1497, 4294901760
        %1499 = vmatprep.subr.mxu0 %v1498
        %v1500 = vand.u32 %v1151, 4294901760
        %v1501 = vsub.f32 %v1151, %v1500
        %v1502 = vand.u32 %v1501, 4294901760
        %v1503 = vsub.f32 %v1501, %v1502
        %v1504 = vand.u32 %v1503, 4294901760
        %1505 = vmatpush1.msra.mxu0 %v1504
        %v1506 = vand.u32 %v1154, 4294901760
        %v1507 = vsub.f32 %v1154, %v1506
        %v1508 = vand.u32 %v1507, 4294901760
        %v1509 = vsub.f32 %v1507, %v1508
        %v1510 = vand.u32 %v1509, 4294901760
        %1511 = vmatprep.subr.mxu0 %v1510
        %v1512 = vand.u32 %v1153, 4294901760
        %v1513 = vsub.f32 %v1153, %v1512
        %v1514 = vand.u32 %v1513, 4294901760
        %v1515 = vsub.f32 %v1513, %v1514
        %v1516 = vand.u32 %v1515, 4294901760
        %1517 = vmatpush1.msra.mxu0 %v1516
        %v1518 = vand.u32 %v1156, 4294901760
        %v1519 = vsub.f32 %v1156, %v1518
        %v1520 = vand.u32 %v1519, 4294901760
        %v1521 = vsub.f32 %v1519, %v1520
        %v1522 = vand.u32 %v1521, 4294901760
        %1523 = vmatprep.subr.mxu0 %v1522
        %v1524 = vand.u32 %v1155, 4294901760
        %v1525 = vsub.f32 %v1155, %v1524
        %v1526 = vand.u32 %v1525, 4294901760
        %v1527 = vsub.f32 %v1525, %v1526
        %v1528 = vand.u32 %v1527, 4294901760
        %1529 = vmatpush1.msra.mxu0 %v1528
        %v1530 = vand.u32 %v1158, 4294901760
        %v1531 = vsub.f32 %v1158, %v1530
        %v1532 = vand.u32 %v1531, 4294901760
        %v1533 = vsub.f32 %v1531, %v1532
        %v1534 = vand.u32 %v1533, 4294901760
        %1535 = vmatprep.subr.mxu0 %v1534
        %v1536 = vand.u32 %v1157, 4294901760
        %v1537 = vsub.f32 %v1157, %v1536
        %v1538 = vand.u32 %v1537, 4294901760
        %v1539 = vsub.f32 %v1537, %v1538
        %v1540 = vand.u32 %v1539, 4294901760
        %1541 = vmatpush1.msra.mxu0 %v1540
        %v1542 = vand.u32 %v1160, 4294901760
        %v1543 = vsub.f32 %v1160, %v1542
        %v1544 = vand.u32 %v1543, 4294901760
        %v1545 = vsub.f32 %v1543, %v1544
        %v1546 = vand.u32 %v1545, 4294901760
        %1547 = vmatprep.subr.mxu0 %v1546
        %v1548 = vand.u32 %v1159, 4294901760
        %v1549 = vsub.f32 %v1159, %v1548
        %v1550 = vand.u32 %v1549, 4294901760
        %v1551 = vsub.f32 %v1549, %v1550
        %v1552 = vand.u32 %v1551, 4294901760
        %1553 = vmatpush1.msra.mxu0 %v1552
        %v1554 = vand.u32 %v1162, 4294901760
        %v1555 = vsub.f32 %v1162, %v1554
        %v1556 = vand.u32 %v1555, 4294901760
        %v1557 = vsub.f32 %v1555, %v1556
        %v1558 = vand.u32 %v1557, 4294901760
        %1559 = vmatprep.subr.mxu0 %v1558
        %v1560 = vand.u32 %v1161, 4294901760
        %v1561 = vsub.f32 %v1161, %v1560
        %v1562 = vand.u32 %v1561, 4294901760
        %v1563 = vsub.f32 %v1561, %v1562
        %v1564 = vand.u32 %v1563, 4294901760
        %1565 = vmatpush1.msra.mxu0 %v1564
        %v1566 = vand.u32 %v1164, 4294901760
        %v1567 = vsub.f32 %v1164, %v1566
        %v1568 = vand.u32 %v1567, 4294901760
        %v1569 = vsub.f32 %v1567, %v1568
        %v1570 = vand.u32 %v1569, 4294901760
        %1571 = vmatprep.subr.mxu0 %v1570
        %v1572 = vand.u32 %v1163, 4294901760
        %v1573 = vsub.f32 %v1163, %v1572
        %v1574 = vand.u32 %v1573, 4294901760
        %v1575 = vsub.f32 %v1573, %v1574
        %v1576 = vand.u32 %v1575, 4294901760
        %1577 = vmatpush1.msra.mxu0 %v1576
        %v1578 = vand.u32 %v1166, 4294901760
        %v1579 = vsub.f32 %v1166, %v1578
        %v1580 = vand.u32 %v1579, 4294901760
        %v1581 = vsub.f32 %v1579, %v1580
        %v1582 = vand.u32 %v1581, 4294901760
        %1583 = vmatprep.subr.mxu0 %v1582
        %v1584 = vand.u32 %v1165, 4294901760
        %v1585 = vsub.f32 %v1165, %v1584
        %v1586 = vand.u32 %v1585, 4294901760
        %v1587 = vsub.f32 %v1585, %v1586
        %v1588 = vand.u32 %v1587, 4294901760
        %1589 = vmatpush1.msra.mxu0 %v1588
        %v1590 = vand.u32 %v1168, 4294901760
        %v1591 = vsub.f32 %v1168, %v1590
        %v1592 = vand.u32 %v1591, 4294901760
        %v1593 = vsub.f32 %v1591, %v1592
        %v1594 = vand.u32 %v1593, 4294901760
        %1595 = vmatprep.subr.mxu0 %v1594
        %v1596 = vand.u32 %v1167, 4294901760
        %v1597 = vsub.f32 %v1167, %v1596
        %v1598 = vand.u32 %v1597, 4294901760
        %v1599 = vsub.f32 %v1597, %v1598
        %v1600 = vand.u32 %v1599, 4294901760
        %1601 = vmatpush1.msra.mxu0 %v1600
        %v1602 = vand.u32 %v1170, 4294901760
        %v1603 = vsub.f32 %v1170, %v1602
        %v1604 = vand.u32 %v1603, 4294901760
        %v1605 = vsub.f32 %v1603, %v1604
        %v1606 = vand.u32 %v1605, 4294901760
        %1607 = vmatprep.subr.mxu0 %v1606
        %v1608 = vand.u32 %v1169, 4294901760
        %v1609 = vsub.f32 %v1169, %v1608
        %v1610 = vand.u32 %v1609, 4294901760
        %v1611 = vsub.f32 %v1609, %v1610
        %v1612 = vand.u32 %v1611, 4294901760
        %1613 = vmatpush1.msra.mxu0 %v1612
        %v1614 = vand.u32 %v1172, 4294901760
        %v1615 = vsub.f32 %v1172, %v1614
        %v1616 = vand.u32 %v1615, 4294901760
        %v1617 = vsub.f32 %v1615, %v1616
        %v1618 = vand.u32 %v1617, 4294901760
        %1619 = vmatprep.subr.mxu0 %v1618
        %v1620 = vand.u32 %v1171, 4294901760
        %v1621 = vsub.f32 %v1171, %v1620
        %v1622 = vand.u32 %v1621, 4294901760
        %v1623 = vsub.f32 %v1621, %v1622
        %v1624 = vand.u32 %v1623, 4294901760
        %1625 = vmatpush1.msra.mxu0 %v1624
        %v1626 = vand.u32 %v1174, 4294901760
        %v1627 = vsub.f32 %v1174, %v1626
        %v1628 = vand.u32 %v1627, 4294901760
        %v1629 = vsub.f32 %v1627, %v1628
        %v1630 = vand.u32 %v1629, 4294901760
        %1631 = vmatprep.subr.mxu0 %v1630
        %v1632 = vand.u32 %v1173, 4294901760
        %v1633 = vsub.f32 %v1173, %v1632
        %v1634 = vand.u32 %v1633, 4294901760
        %v1635 = vsub.f32 %v1633, %v1634
        %v1636 = vand.u32 %v1635, 4294901760
        %1637 = vmatpush1.msra.mxu0 %v1636
        %v1638 = vand.u32 %v1176, 4294901760
        %v1639 = vsub.f32 %v1176, %v1638
        %v1640 = vand.u32 %v1639, 4294901760
        %v1641 = vsub.f32 %v1639, %v1640
        %v1642 = vand.u32 %v1641, 4294901760
        %1643 = vmatprep.subr.mxu0 %v1642
        %v1644 = vand.u32 %v1175, 4294901760
        %v1645 = vsub.f32 %v1175, %v1644
        %v1646 = vand.u32 %v1645, 4294901760
        %v1647 = vsub.f32 %v1645, %v1646
        %v1648 = vand.u32 %v1647, 4294901760
        %1649 = vmatpush1.msra.mxu0 %v1648
        %v1650 = vand.u32 %v1178, 4294901760
        %v1651 = vsub.f32 %v1178, %v1650
        %v1652 = vand.u32 %v1651, 4294901760
        %v1653 = vsub.f32 %v1651, %v1652
        %v1654 = vand.u32 %v1653, 4294901760
        %1655 = vmatprep.subr.mxu0 %v1654
        %v1656 = vand.u32 %v1177, 4294901760
        %v1657 = vsub.f32 %v1177, %v1656
        %v1658 = vand.u32 %v1657, 4294901760
        %v1659 = vsub.f32 %v1657, %v1658
        %v1660 = vand.u32 %v1659, 4294901760
        %1661 = vmatpush1.msra.mxu0 %v1660
        %v1662 = vand.u32 %v1180, 4294901760
        %v1663 = vsub.f32 %v1180, %v1662
        %v1664 = vand.u32 %v1663, 4294901760
        %v1665 = vsub.f32 %v1663, %v1664
        %v1666 = vand.u32 %v1665, 4294901760
        %1667 = vmatprep.subr.mxu0 %v1666
        %v1668 = vand.u32 %v1179, 4294901760
        %v1669 = vsub.f32 %v1179, %v1668
        %v1670 = vand.u32 %v1669, 4294901760
        %v1671 = vsub.f32 %v1669, %v1670
        %v1672 = vand.u32 %v1671, 4294901760
        %1673 = vmatpush1.msra.mxu0 %v1672
        %v1674 = vand.u32 %v1182, 4294901760
        %v1675 = vsub.f32 %v1182, %v1674
        %v1676 = vand.u32 %v1675, 4294901760
        %v1677 = vsub.f32 %v1675, %v1676
        %v1678 = vand.u32 %v1677, 4294901760
        %1679 = vmatprep.subr.mxu0 %v1678
        %v1680 = vand.u32 %v1181, 4294901760
        %v1681 = vsub.f32 %v1181, %v1680
        %v1682 = vand.u32 %v1681, 4294901760
        %v1683 = vsub.f32 %v1681, %v1682
        %v1684 = vand.u32 %v1683, 4294901760
        %1685 = vmatpush1.msra.mxu0 %v1684
        %v1686 = vand.u32 %v1184, 4294901760
        %v1687 = vsub.f32 %v1184, %v1686
        %v1688 = vand.u32 %v1687, 4294901760
        %v1689 = vsub.f32 %v1687, %v1688
        %v1690 = vand.u32 %v1689, 4294901760
        %1691 = vmatprep.subr.mxu0 %v1690
        %v1692 = vand.u32 %v1183, 4294901760
        %v1693 = vsub.f32 %v1183, %v1692
        %v1694 = vand.u32 %v1693, 4294901760
        %v1695 = vsub.f32 %v1693, %v1694
        %v1696 = vand.u32 %v1695, 4294901760
        %1697 = vmatpush1.msra.mxu0 %v1696
        %v1698 = vand.u32 %v1186, 4294901760
        %v1699 = vsub.f32 %v1186, %v1698
        %v1700 = vand.u32 %v1699, 4294901760
        %v1701 = vsub.f32 %v1699, %v1700
        %v1702 = vand.u32 %v1701, 4294901760
        %1703 = vmatprep.subr.mxu0 %v1702
        %v1704 = vand.u32 %v1185, 4294901760
        %v1705 = vsub.f32 %v1185, %v1704
        %v1706 = vand.u32 %v1705, 4294901760
        %v1707 = vsub.f32 %v1705, %v1706
        %v1708 = vand.u32 %v1707, 4294901760
        %1709 = vmatpush1.msra.mxu0 %v1708
        %v1710 = vand.u32 %v1188, 4294901760
        %v1711 = vsub.f32 %v1188, %v1710
        %v1712 = vand.u32 %v1711, 4294901760
        %v1713 = vsub.f32 %v1711, %v1712
        %v1714 = vand.u32 %v1713, 4294901760
        %1715 = vmatprep.subr.mxu0 %v1714
        %v1716 = vand.u32 %v1187, 4294901760
        %v1717 = vsub.f32 %v1187, %v1716
        %v1718 = vand.u32 %v1717, 4294901760
        %v1719 = vsub.f32 %v1717, %v1718
        %v1720 = vand.u32 %v1719, 4294901760
        %1721 = vmatpush1.msra.mxu0 %v1720
        %v1722 = vand.u32 %v1191, 4294901760
        %1723 = vmatprep.mubr.f32.mxu0 %v1722
        %v1724 = vand.u32 %v1189, 4294901760
        %1725 = vmatmul.mubr.f32.gmra.mrb[0].mxu0 %v1724
        %v1726 = vpop.f32.mrb[0].mxu0
        %v1727 = vadd.f32 %v1334, %v1726
        %v1728 = vpop.f32.mrb[0].mxu0
        %v1729 = vadd.f32 %v1336, %v1728
        %1730 = vdwg.mxu0
        %v1731 = vand.u32 %v1126, 4294901760
        %v1732 = vsub.f32 %v1126, %v1731
        %1733 = vmatprep.subr.mxu0 %v1732
        %v1734 = vand.u32 %v1125, 4294901760
        %v1735 = vsub.f32 %v1125, %v1734
        %1736 = vmatpush1.msra.mxu0 %v1735
        %v1737 = vand.u32 %v1128, 4294901760
        %v1738 = vsub.f32 %v1128, %v1737
        %1739 = vmatprep.subr.mxu0 %v1738
        %v1740 = vand.u32 %v1127, 4294901760
        %v1741 = vsub.f32 %v1127, %v1740
        %1742 = vmatpush1.msra.mxu0 %v1741
        %v1743 = vand.u32 %v1130, 4294901760
        %v1744 = vsub.f32 %v1130, %v1743
        %1745 = vmatprep.subr.mxu0 %v1744
        %v1746 = vand.u32 %v1129, 4294901760
        %v1747 = vsub.f32 %v1129, %v1746
        %1748 = vmatpush1.msra.mxu0 %v1747
        %v1749 = vand.u32 %v1132, 4294901760
        %v1750 = vsub.f32 %v1132, %v1749
        %1751 = vmatprep.subr.mxu0 %v1750
        %v1752 = vand.u32 %v1131, 4294901760
        %v1753 = vsub.f32 %v1131, %v1752
        %1754 = vmatpush1.msra.mxu0 %v1753
        %v1755 = vand.u32 %v1134, 4294901760
        %v1756 = vsub.f32 %v1134, %v1755
        %1757 = vmatprep.subr.mxu0 %v1756
        %v1758 = vand.u32 %v1133, 4294901760
        %v1759 = vsub.f32 %v1133, %v1758
        %1760 = vmatpush1.msra.mxu0 %v1759
        %v1761 = vand.u32 %v1136, 4294901760
        %v1762 = vsub.f32 %v1136, %v1761
        %1763 = vmatprep.subr.mxu0 %v1762
        %v1764 = vand.u32 %v1135, 4294901760
        %v1765 = vsub.f32 %v1135, %v1764
        %1766 = vmatpush1.msra.mxu0 %v1765
        %v1767 = vand.u32 %v1138, 4294901760
        %v1768 = vsub.f32 %v1138, %v1767
        %1769 = vmatprep.subr.mxu0 %v1768
        %v1770 = vand.u32 %v1137, 4294901760
        %v1771 = vsub.f32 %v1137, %v1770
        %1772 = vmatpush1.msra.mxu0 %v1771
        %v1773 = vand.u32 %v1140, 4294901760
        %v1774 = vsub.f32 %v1140, %v1773
        %1775 = vmatprep.subr.mxu0 %v1774
        %v1776 = vand.u32 %v1139, 4294901760
        %v1777 = vsub.f32 %v1139, %v1776
        %1778 = vmatpush1.msra.mxu0 %v1777
        %v1779 = vand.u32 %v1142, 4294901760
        %v1780 = vsub.f32 %v1142, %v1779
        %1781 = vmatprep.subr.mxu0 %v1780
        %v1782 = vand.u32 %v1141, 4294901760
        %v1783 = vsub.f32 %v1141, %v1782
        %1784 = vmatpush1.msra.mxu0 %v1783
        %v1785 = vand.u32 %v1144, 4294901760
        %v1786 = vsub.f32 %v1144, %v1785
        %1787 = vmatprep.subr.mxu0 %v1786
        %v1788 = vand.u32 %v1143, 4294901760
        %v1789 = vsub.f32 %v1143, %v1788
        %1790 = vmatpush1.msra.mxu0 %v1789
        %v1791 = vand.u32 %v1146, 4294901760
        %v1792 = vsub.f32 %v1146, %v1791
        %1793 = vmatprep.subr.mxu0 %v1792
        %v1794 = vand.u32 %v1145, 4294901760
        %v1795 = vsub.f32 %v1145, %v1794
        %1796 = vmatpush1.msra.mxu0 %v1795
        %v1797 = vand.u32 %v1148, 4294901760
        %v1798 = vsub.f32 %v1148, %v1797
        %1799 = vmatprep.subr.mxu0 %v1798
        %v1800 = vand.u32 %v1147, 4294901760
        %v1801 = vsub.f32 %v1147, %v1800
        %1802 = vmatpush1.msra.mxu0 %v1801
        %v1803 = vand.u32 %v1150, 4294901760
        %v1804 = vsub.f32 %v1150, %v1803
        %1805 = vmatprep.subr.mxu0 %v1804
        %v1806 = vand.u32 %v1149, 4294901760
        %v1807 = vsub.f32 %v1149, %v1806
        %1808 = vmatpush1.msra.mxu0 %v1807
        %v1809 = vand.u32 %v1152, 4294901760
        %v1810 = vsub.f32 %v1152, %v1809
        %1811 = vmatprep.subr.mxu0 %v1810
        %v1812 = vand.u32 %v1151, 4294901760
        %v1813 = vsub.f32 %v1151, %v1812
        %1814 = vmatpush1.msra.mxu0 %v1813
        %v1815 = vand.u32 %v1154, 4294901760
        %v1816 = vsub.f32 %v1154, %v1815
        %1817 = vmatprep.subr.mxu0 %v1816
        %v1818 = vand.u32 %v1153, 4294901760
        %v1819 = vsub.f32 %v1153, %v1818
        %1820 = vmatpush1.msra.mxu0 %v1819
        %v1821 = vand.u32 %v1156, 4294901760
        %v1822 = vsub.f32 %v1156, %v1821
        %1823 = vmatprep.subr.mxu0 %v1822
        %v1824 = vand.u32 %v1155, 4294901760
        %v1825 = vsub.f32 %v1155, %v1824
        %1826 = vmatpush1.msra.mxu0 %v1825
        %v1827 = vand.u32 %v1158, 4294901760
        %v1828 = vsub.f32 %v1158, %v1827
        %1829 = vmatprep.subr.mxu0 %v1828
        %v1830 = vand.u32 %v1157, 4294901760
        %v1831 = vsub.f32 %v1157, %v1830
        %1832 = vmatpush1.msra.mxu0 %v1831
        %v1833 = vand.u32 %v1160, 4294901760
        %v1834 = vsub.f32 %v1160, %v1833
        %1835 = vmatprep.subr.mxu0 %v1834
        %v1836 = vand.u32 %v1159, 4294901760
        %v1837 = vsub.f32 %v1159, %v1836
        %1838 = vmatpush1.msra.mxu0 %v1837
        %v1839 = vand.u32 %v1162, 4294901760
        %v1840 = vsub.f32 %v1162, %v1839
        %1841 = vmatprep.subr.mxu0 %v1840
        %v1842 = vand.u32 %v1161, 4294901760
        %v1843 = vsub.f32 %v1161, %v1842
        %1844 = vmatpush1.msra.mxu0 %v1843
        %v1845 = vand.u32 %v1164, 4294901760
        %v1846 = vsub.f32 %v1164, %v1845
        %1847 = vmatprep.subr.mxu0 %v1846
        %v1848 = vand.u32 %v1163, 4294901760
        %v1849 = vsub.f32 %v1163, %v1848
        %1850 = vmatpush1.msra.mxu0 %v1849
        %v1851 = vand.u32 %v1166, 4294901760
        %v1852 = vsub.f32 %v1166, %v1851
        %1853 = vmatprep.subr.mxu0 %v1852
        %v1854 = vand.u32 %v1165, 4294901760
        %v1855 = vsub.f32 %v1165, %v1854
        %1856 = vmatpush1.msra.mxu0 %v1855
        %v1857 = vand.u32 %v1168, 4294901760
        %v1858 = vsub.f32 %v1168, %v1857
        %1859 = vmatprep.subr.mxu0 %v1858
        %v1860 = vand.u32 %v1167, 4294901760
        %v1861 = vsub.f32 %v1167, %v1860
        %1862 = vmatpush1.msra.mxu0 %v1861
        %v1863 = vand.u32 %v1170, 4294901760
        %v1864 = vsub.f32 %v1170, %v1863
        %1865 = vmatprep.subr.mxu0 %v1864
        %v1866 = vand.u32 %v1169, 4294901760
        %v1867 = vsub.f32 %v1169, %v1866
        %1868 = vmatpush1.msra.mxu0 %v1867
        %v1869 = vand.u32 %v1172, 4294901760
        %v1870 = vsub.f32 %v1172, %v1869
        %1871 = vmatprep.subr.mxu0 %v1870
        %v1872 = vand.u32 %v1171, 4294901760
        %v1873 = vsub.f32 %v1171, %v1872
        %1874 = vmatpush1.msra.mxu0 %v1873
        %v1875 = vand.u32 %v1174, 4294901760
        %v1876 = vsub.f32 %v1174, %v1875
        %1877 = vmatprep.subr.mxu0 %v1876
        %v1878 = vand.u32 %v1173, 4294901760
        %v1879 = vsub.f32 %v1173, %v1878
        %1880 = vmatpush1.msra.mxu0 %v1879
        %v1881 = vand.u32 %v1176, 4294901760
        %v1882 = vsub.f32 %v1176, %v1881
        %1883 = vmatprep.subr.mxu0 %v1882
        %v1884 = vand.u32 %v1175, 4294901760
        %v1885 = vsub.f32 %v1175, %v1884
        %1886 = vmatpush1.msra.mxu0 %v1885
        %v1887 = vand.u32 %v1178, 4294901760
        %v1888 = vsub.f32 %v1178, %v1887
        %1889 = vmatprep.subr.mxu0 %v1888
        %v1890 = vand.u32 %v1177, 4294901760
        %v1891 = vsub.f32 %v1177, %v1890
        %1892 = vmatpush1.msra.mxu0 %v1891
        %v1893 = vand.u32 %v1180, 4294901760
        %v1894 = vsub.f32 %v1180, %v1893
        %1895 = vmatprep.subr.mxu0 %v1894
        %v1896 = vand.u32 %v1179, 4294901760
        %v1897 = vsub.f32 %v1179, %v1896
        %1898 = vmatpush1.msra.mxu0 %v1897
        %v1899 = vand.u32 %v1182, 4294901760
        %v1900 = vsub.f32 %v1182, %v1899
        %1901 = vmatprep.subr.mxu0 %v1900
        %v1902 = vand.u32 %v1181, 4294901760
        %v1903 = vsub.f32 %v1181, %v1902
        %1904 = vmatpush1.msra.mxu0 %v1903
        %v1905 = vand.u32 %v1184, 4294901760
        %v1906 = vsub.f32 %v1184, %v1905
        %1907 = vmatprep.subr.mxu0 %v1906
        %v1908 = vand.u32 %v1183, 4294901760
        %v1909 = vsub.f32 %v1183, %v1908
        %1910 = vmatpush1.msra.mxu0 %v1909
        %v1911 = vand.u32 %v1186, 4294901760
        %v1912 = vsub.f32 %v1186, %v1911
        %1913 = vmatprep.subr.mxu0 %v1912
        %v1914 = vand.u32 %v1185, 4294901760
        %v1915 = vsub.f32 %v1185, %v1914
        %1916 = vmatpush1.msra.mxu0 %v1915
        %v1917 = vand.u32 %v1188, 4294901760
        %v1918 = vsub.f32 %v1188, %v1917
        %1919 = vmatprep.subr.mxu0 %v1918
        %v1920 = vand.u32 %v1187, 4294901760
        %v1921 = vsub.f32 %v1187, %v1920
        %1922 = vmatpush1.msra.mxu0 %v1921
        %v1923 = vand.u32 %v1191, 4294901760
        %v1924 = vsub.f32 %v1191, %v1923
        %1925 = vmatprep.mubr.f32.mxu0 %v1924
        %v1926 = vand.u32 %v1189, 4294901760
        %v1927 = vsub.f32 %v1189, %v1926
        %1928 = vmatmul.mubr.f32.gmra.mrb[0].mxu0 %v1927
        %v1929 = vpop.f32.mrb[0].mxu0
        %v1930 = vadd.f32 %v1727, %v1929
        %v1931 = vpop.f32.mrb[0].mxu0
        %v1932 = vadd.f32 %v1729, %v1931
        %1933 = vdwg.mxu0
        %v1934 = vand.u32 %v1126, 4294901760
        %1935 = vmatprep.subr.mxu0 %v1934
        %v1936 = vand.u32 %v1125, 4294901760
        %1937 = vmatpush1.msra.mxu0 %v1936
        %v1938 = vand.u32 %v1128, 4294901760
        %1939 = vmatprep.subr.mxu0 %v1938
        %v1940 = vand.u32 %v1127, 4294901760
        %1941 = vmatpush1.msra.mxu0 %v1940
        %v1942 = vand.u32 %v1130, 4294901760
        %1943 = vmatprep.subr.mxu0 %v1942
        %v1944 = vand.u32 %v1129, 4294901760
        %1945 = vmatpush1.msra.mxu0 %v1944
        %v1946 = vand.u32 %v1132, 4294901760
        %1947 = vmatprep.subr.mxu0 %v1946
        %v1948 = vand.u32 %v1131, 4294901760
        %1949 = vmatpush1.msra.mxu0 %v1948
        %v1950 = vand.u32 %v1134, 4294901760
        %1951 = vmatprep.subr.mxu0 %v1950
        %v1952 = vand.u32 %v1133, 4294901760
        %1953 = vmatpush1.msra.mxu0 %v1952
        %v1954 = vand.u32 %v1136, 4294901760
        %1955 = vmatprep.subr.mxu0 %v1954
        %v1956 = vand.u32 %v1135, 4294901760
        %1957 = vmatpush1.msra.mxu0 %v1956
        %v1958 = vand.u32 %v1138, 4294901760
        %1959 = vmatprep.subr.mxu0 %v1958
        %v1960 = vand.u32 %v1137, 4294901760
        %1961 = vmatpush1.msra.mxu0 %v1960
        %v1962 = vand.u32 %v1140, 4294901760
        %1963 = vmatprep.subr.mxu0 %v1962
        %v1964 = vand.u32 %v1139, 4294901760
        %1965 = vmatpush1.msra.mxu0 %v1964
        %v1966 = vand.u32 %v1142, 4294901760
        %1967 = vmatprep.subr.mxu0 %v1966
        %v1968 = vand.u32 %v1141, 4294901760
        %1969 = vmatpush1.msra.mxu0 %v1968
        %v1970 = vand.u32 %v1144, 4294901760
        %1971 = vmatprep.subr.mxu0 %v1970
        %v1972 = vand.u32 %v1143, 4294901760
        %1973 = vmatpush1.msra.mxu0 %v1972
        %v1974 = vand.u32 %v1146, 4294901760
        %1975 = vmatprep.subr.mxu0 %v1974
        %v1976 = vand.u32 %v1145, 4294901760
        %1977 = vmatpush1.msra.mxu0 %v1976
        %v1978 = vand.u32 %v1148, 4294901760
        %1979 = vmatprep.subr.mxu0 %v1978
        %v1980 = vand.u32 %v1147, 4294901760
        %1981 = vmatpush1.msra.mxu0 %v1980
        %v1982 = vand.u32 %v1150, 4294901760
        %1983 = vmatprep.subr.mxu0 %v1982
        %v1984 = vand.u32 %v1149, 4294901760
        %1985 = vmatpush1.msra.mxu0 %v1984
        %v1986 = vand.u32 %v1152, 4294901760
        %1987 = vmatprep.subr.mxu0 %v1986
        %v1988 = vand.u32 %v1151, 4294901760
        %1989 = vmatpush1.msra.mxu0 %v1988
        %v1990 = vand.u32 %v1154, 4294901760
        %1991 = vmatprep.subr.mxu0 %v1990
        %v1992 = vand.u32 %v1153, 4294901760
        %1993 = vmatpush1.msra.mxu0 %v1992
        %v1994 = vand.u32 %v1156, 4294901760
        %1995 = vmatprep.subr.mxu0 %v1994
        %v1996 = vand.u32 %v1155, 4294901760
        %1997 = vmatpush1.msra.mxu0 %v1996
        %v1998 = vand.u32 %v1158, 4294901760
        %1999 = vmatprep.subr.mxu0 %v1998
        %v2000 = vand.u32 %v1157, 4294901760
        %2001 = vmatpush1.msra.mxu0 %v2000
        %v2002 = vand.u32 %v1160, 4294901760
        %2003 = vmatprep.subr.mxu0 %v2002
        %v2004 = vand.u32 %v1159, 4294901760
        %2005 = vmatpush1.msra.mxu0 %v2004
        %v2006 = vand.u32 %v1162, 4294901760
        %2007 = vmatprep.subr.mxu0 %v2006
        %v2008 = vand.u32 %v1161, 4294901760
        %2009 = vmatpush1.msra.mxu0 %v2008
        %v2010 = vand.u32 %v1164, 4294901760
        %2011 = vmatprep.subr.mxu0 %v2010
        %v2012 = vand.u32 %v1163, 4294901760
        %2013 = vmatpush1.msra.mxu0 %v2012
        %v2014 = vand.u32 %v1166, 4294901760
        %2015 = vmatprep.subr.mxu0 %v2014
        %v2016 = vand.u32 %v1165, 4294901760
        %2017 = vmatpush1.msra.mxu0 %v2016
        %v2018 = vand.u32 %v1168, 4294901760
        %2019 = vmatprep.subr.mxu0 %v2018
        %v2020 = vand.u32 %v1167, 4294901760
        %2021 = vmatpush1.msra.mxu0 %v2020
        %v2022 = vand.u32 %v1170, 4294901760
        %2023 = vmatprep.subr.mxu0 %v2022
        %v2024 = vand.u32 %v1169, 4294901760
        %2025 = vmatpush1.msra.mxu0 %v2024
        %v2026 = vand.u32 %v1172, 4294901760
        %2027 = vmatprep.subr.mxu0 %v2026
        %v2028 = vand.u32 %v1171, 4294901760
        %2029 = vmatpush1.msra.mxu0 %v2028
        %v2030 = vand.u32 %v1174, 4294901760
        %2031 = vmatprep.subr.mxu0 %v2030
        %v2032 = vand.u32 %v1173, 4294901760
        %2033 = vmatpush1.msra.mxu0 %v2032
        %v2034 = vand.u32 %v1176, 4294901760
        %2035 = vmatprep.subr.mxu0 %v2034
        %v2036 = vand.u32 %v1175, 4294901760
        %2037 = vmatpush1.msra.mxu0 %v2036
        %v2038 = vand.u32 %v1178, 4294901760
        %2039 = vmatprep.subr.mxu0 %v2038
        %v2040 = vand.u32 %v1177, 4294901760
        %2041 = vmatpush1.msra.mxu0 %v2040
        %v2042 = vand.u32 %v1180, 4294901760
        %2043 = vmatprep.subr.mxu0 %v2042
        %v2044 = vand.u32 %v1179, 4294901760
        %2045 = vmatpush1.msra.mxu0 %v2044
        %v2046 = vand.u32 %v1182, 4294901760
        %2047 = vmatprep.subr.mxu0 %v2046
        %v2048 = vand.u32 %v1181, 4294901760
        %2049 = vmatpush1.msra.mxu0 %v2048
        %v2050 = vand.u32 %v1184, 4294901760
        %2051 = vmatprep.subr.mxu0 %v2050
        %v2052 = vand.u32 %v1183, 4294901760
        %2053 = vmatpush1.msra.mxu0 %v2052
        %v2054 = vand.u32 %v1186, 4294901760
        %2055 = vmatprep.subr.mxu0 %v2054
        %v2056 = vand.u32 %v1185, 4294901760
        %2057 = vmatpush1.msra.mxu0 %v2056
        %v2058 = vand.u32 %v1188, 4294901760
        %2059 = vmatprep.subr.mxu0 %v2058
        %v2060 = vand.u32 %v1187, 4294901760
        %2061 = vmatpush1.msra.mxu0 %v2060
        %v2062 = vand.u32 %v1191, 4294901760
        %v2063 = vsub.f32 %v1191, %v2062
        %v2064 = vand.u32 %v2063, 4294901760
        %2065 = vmatprep.mubr.f32.mxu0 %v2064
        %v2066 = vand.u32 %v1189, 4294901760
        %v2067 = vsub.f32 %v1189, %v2066
        %v2068 = vand.u32 %v2067, 4294901760
        %2069 = vmatmul.mubr.f32.gmra.mrb[0].mxu0 %v2068
        %v2070 = vpop.f32.mrb[0].mxu0
        %v2071 = vadd.f32 %v1930, %v2070
        %v2072 = vpop.f32.mrb[0].mxu0
        %v2073 = vadd.f32 %v1932, %v2072
        %2074 = vdwg.mxu0
        %v2075 = vand.u32 %v1126, 4294901760
        %v2076 = vsub.f32 %v1126, %v2075
        %v2077 = vand.u32 %v2076, 4294901760
        %2078 = vmatprep.subr.mxu0 %v2077
        %v2079 = vand.u32 %v1125, 4294901760
        %v2080 = vsub.f32 %v1125, %v2079
        %v2081 = vand.u32 %v2080, 4294901760
        %2082 = vmatpush1.msra.mxu0 %v2081
        %v2083 = vand.u32 %v1128, 4294901760
        %v2084 = vsub.f32 %v1128, %v2083
        %v2085 = vand.u32 %v2084, 4294901760
        %2086 = vmatprep.subr.mxu0 %v2085
        %v2087 = vand.u32 %v1127, 4294901760
        %v2088 = vsub.f32 %v1127, %v2087
        %v2089 = vand.u32 %v2088, 4294901760
        %2090 = vmatpush1.msra.mxu0 %v2089
        %v2091 = vand.u32 %v1130, 4294901760
        %v2092 = vsub.f32 %v1130, %v2091
        %v2093 = vand.u32 %v2092, 4294901760
        %2094 = vmatprep.subr.mxu0 %v2093
        %v2095 = vand.u32 %v1129, 4294901760
        %v2096 = vsub.f32 %v1129, %v2095
        %v2097 = vand.u32 %v2096, 4294901760
        %2098 = vmatpush1.msra.mxu0 %v2097
        %v2099 = vand.u32 %v1132, 4294901760
        %v2100 = vsub.f32 %v1132, %v2099
        %v2101 = vand.u32 %v2100, 4294901760
        %2102 = vmatprep.subr.mxu0 %v2101
        %v2103 = vand.u32 %v1131, 4294901760
        %v2104 = vsub.f32 %v1131, %v2103
        %v2105 = vand.u32 %v2104, 4294901760
        %2106 = vmatpush1.msra.mxu0 %v2105
        %v2107 = vand.u32 %v1134, 4294901760
        %v2108 = vsub.f32 %v1134, %v2107
        %v2109 = vand.u32 %v2108, 4294901760
        %2110 = vmatprep.subr.mxu0 %v2109
        %v2111 = vand.u32 %v1133, 4294901760
        %v2112 = vsub.f32 %v1133, %v2111
        %v2113 = vand.u32 %v2112, 4294901760
        %2114 = vmatpush1.msra.mxu0 %v2113
        %v2115 = vand.u32 %v1136, 4294901760
        %v2116 = vsub.f32 %v1136, %v2115
        %v2117 = vand.u32 %v2116, 4294901760
        %2118 = vmatprep.subr.mxu0 %v2117
        %v2119 = vand.u32 %v1135, 4294901760
        %v2120 = vsub.f32 %v1135, %v2119
        %v2121 = vand.u32 %v2120, 4294901760
        %2122 = vmatpush1.msra.mxu0 %v2121
        %v2123 = vand.u32 %v1138, 4294901760
        %v2124 = vsub.f32 %v1138, %v2123
        %v2125 = vand.u32 %v2124, 4294901760
        %2126 = vmatprep.subr.mxu0 %v2125
        %v2127 = vand.u32 %v1137, 4294901760
        %v2128 = vsub.f32 %v1137, %v2127
        %v2129 = vand.u32 %v2128, 4294901760
        %2130 = vmatpush1.msra.mxu0 %v2129
        %v2131 = vand.u32 %v1140, 4294901760
        %v2132 = vsub.f32 %v1140, %v2131
        %v2133 = vand.u32 %v2132, 4294901760
        %2134 = vmatprep.subr.mxu0 %v2133
        %v2135 = vand.u32 %v1139, 4294901760
        %v2136 = vsub.f32 %v1139, %v2135
        %v2137 = vand.u32 %v2136, 4294901760
        %2138 = vmatpush1.msra.mxu0 %v2137
        %v2139 = vand.u32 %v1142, 4294901760
        %v2140 = vsub.f32 %v1142, %v2139
        %v2141 = vand.u32 %v2140, 4294901760
        %2142 = vmatprep.subr.mxu0 %v2141
        %v2143 = vand.u32 %v1141, 4294901760
        %v2144 = vsub.f32 %v1141, %v2143
        %v2145 = vand.u32 %v2144, 4294901760
        %2146 = vmatpush1.msra.mxu0 %v2145
        %v2147 = vand.u32 %v1144, 4294901760
        %v2148 = vsub.f32 %v1144, %v2147
        %v2149 = vand.u32 %v2148, 4294901760
        %2150 = vmatprep.subr.mxu0 %v2149
        %v2151 = vand.u32 %v1143, 4294901760
        %v2152 = vsub.f32 %v1143, %v2151
        %v2153 = vand.u32 %v2152, 4294901760
        %2154 = vmatpush1.msra.mxu0 %v2153
        %v2155 = vand.u32 %v1146, 4294901760
        %v2156 = vsub.f32 %v1146, %v2155
        %v2157 = vand.u32 %v2156, 4294901760
        %2158 = vmatprep.subr.mxu0 %v2157
        %v2159 = vand.u32 %v1145, 4294901760
        %v2160 = vsub.f32 %v1145, %v2159
        %v2161 = vand.u32 %v2160, 4294901760
        %2162 = vmatpush1.msra.mxu0 %v2161
        %v2163 = vand.u32 %v1148, 4294901760
        %v2164 = vsub.f32 %v1148, %v2163
        %v2165 = vand.u32 %v2164, 4294901760
        %2166 = vmatprep.subr.mxu0 %v2165
        %v2167 = vand.u32 %v1147, 4294901760
        %v2168 = vsub.f32 %v1147, %v2167
        %v2169 = vand.u32 %v2168, 4294901760
        %2170 = vmatpush1.msra.mxu0 %v2169
        %v2171 = vand.u32 %v1150, 4294901760
        %v2172 = vsub.f32 %v1150, %v2171
        %v2173 = vand.u32 %v2172, 4294901760
        %2174 = vmatprep.subr.mxu0 %v2173
        %v2175 = vand.u32 %v1149, 4294901760
        %v2176 = vsub.f32 %v1149, %v2175
        %v2177 = vand.u32 %v2176, 4294901760
        %2178 = vmatpush1.msra.mxu0 %v2177
        %v2179 = vand.u32 %v1152, 4294901760
        %v2180 = vsub.f32 %v1152, %v2179
        %v2181 = vand.u32 %v2180, 4294901760
        %2182 = vmatprep.subr.mxu0 %v2181
        %v2183 = vand.u32 %v1151, 4294901760
        %v2184 = vsub.f32 %v1151, %v2183
        %v2185 = vand.u32 %v2184, 4294901760
        %2186 = vmatpush1.msra.mxu0 %v2185
        %v2187 = vand.u32 %v1154, 4294901760
        %v2188 = vsub.f32 %v1154, %v2187
        %v2189 = vand.u32 %v2188, 4294901760
        %2190 = vmatprep.subr.mxu0 %v2189
        %v2191 = vand.u32 %v1153, 4294901760
        %v2192 = vsub.f32 %v1153, %v2191
        %v2193 = vand.u32 %v2192, 4294901760
        %2194 = vmatpush1.msra.mxu0 %v2193
        %v2195 = vand.u32 %v1156, 4294901760
        %v2196 = vsub.f32 %v1156, %v2195
        %v2197 = vand.u32 %v2196, 4294901760
        %2198 = vmatprep.subr.mxu0 %v2197
        %v2199 = vand.u32 %v1155, 4294901760
        %v2200 = vsub.f32 %v1155, %v2199
        %v2201 = vand.u32 %v2200, 4294901760
        %2202 = vmatpush1.msra.mxu0 %v2201
        %v2203 = vand.u32 %v1158, 4294901760
        %v2204 = vsub.f32 %v1158, %v2203
        %v2205 = vand.u32 %v2204, 4294901760
        %2206 = vmatprep.subr.mxu0 %v2205
        %v2207 = vand.u32 %v1157, 4294901760
        %v2208 = vsub.f32 %v1157, %v2207
        %v2209 = vand.u32 %v2208, 4294901760
        %2210 = vmatpush1.msra.mxu0 %v2209
        %v2211 = vand.u32 %v1160, 4294901760
        %v2212 = vsub.f32 %v1160, %v2211
        %v2213 = vand.u32 %v2212, 4294901760
        %2214 = vmatprep.subr.mxu0 %v2213
        %v2215 = vand.u32 %v1159, 4294901760
        %v2216 = vsub.f32 %v1159, %v2215
        %v2217 = vand.u32 %v2216, 4294901760
        %2218 = vmatpush1.msra.mxu0 %v2217
        %v2219 = vand.u32 %v1162, 4294901760
        %v2220 = vsub.f32 %v1162, %v2219
        %v2221 = vand.u32 %v2220, 4294901760
        %2222 = vmatprep.subr.mxu0 %v2221
        %v2223 = vand.u32 %v1161, 4294901760
        %v2224 = vsub.f32 %v1161, %v2223
        %v2225 = vand.u32 %v2224, 4294901760
        %2226 = vmatpush1.msra.mxu0 %v2225
        %v2227 = vand.u32 %v1164, 4294901760
        %v2228 = vsub.f32 %v1164, %v2227
        %v2229 = vand.u32 %v2228, 4294901760
        %2230 = vmatprep.subr.mxu0 %v2229
        %v2231 = vand.u32 %v1163, 4294901760
        %v2232 = vsub.f32 %v1163, %v2231
        %v2233 = vand.u32 %v2232, 4294901760
        %2234 = vmatpush1.msra.mxu0 %v2233
        %v2235 = vand.u32 %v1166, 4294901760
        %v2236 = vsub.f32 %v1166, %v2235
        %v2237 = vand.u32 %v2236, 4294901760
        %2238 = vmatprep.subr.mxu0 %v2237
        %v2239 = vand.u32 %v1165, 4294901760
        %v2240 = vsub.f32 %v1165, %v2239
        %v2241 = vand.u32 %v2240, 4294901760
        %2242 = vmatpush1.msra.mxu0 %v2241
        %v2243 = vand.u32 %v1168, 4294901760
        %v2244 = vsub.f32 %v1168, %v2243
        %v2245 = vand.u32 %v2244, 4294901760
        %2246 = vmatprep.subr.mxu0 %v2245
        %v2247 = vand.u32 %v1167, 4294901760
        %v2248 = vsub.f32 %v1167, %v2247
        %v2249 = vand.u32 %v2248, 4294901760
        %2250 = vmatpush1.msra.mxu0 %v2249
        %v2251 = vand.u32 %v1170, 4294901760
        %v2252 = vsub.f32 %v1170, %v2251
        %v2253 = vand.u32 %v2252, 4294901760
        %2254 = vmatprep.subr.mxu0 %v2253
        %v2255 = vand.u32 %v1169, 4294901760
        %v2256 = vsub.f32 %v1169, %v2255
        %v2257 = vand.u32 %v2256, 4294901760
        %2258 = vmatpush1.msra.mxu0 %v2257
        %v2259 = vand.u32 %v1172, 4294901760
        %v2260 = vsub.f32 %v1172, %v2259
        %v2261 = vand.u32 %v2260, 4294901760
        %2262 = vmatprep.subr.mxu0 %v2261
        %v2263 = vand.u32 %v1171, 4294901760
        %v2264 = vsub.f32 %v1171, %v2263
        %v2265 = vand.u32 %v2264, 4294901760
        %2266 = vmatpush1.msra.mxu0 %v2265
        %v2267 = vand.u32 %v1174, 4294901760
        %v2268 = vsub.f32 %v1174, %v2267
        %v2269 = vand.u32 %v2268, 4294901760
        %2270 = vmatprep.subr.mxu0 %v2269
        %v2271 = vand.u32 %v1173, 4294901760
        %v2272 = vsub.f32 %v1173, %v2271
        %v2273 = vand.u32 %v2272, 4294901760
        %2274 = vmatpush1.msra.mxu0 %v2273
        %v2275 = vand.u32 %v1176, 4294901760
        %v2276 = vsub.f32 %v1176, %v2275
        %v2277 = vand.u32 %v2276, 4294901760
        %2278 = vmatprep.subr.mxu0 %v2277
        %v2279 = vand.u32 %v1175, 4294901760
        %v2280 = vsub.f32 %v1175, %v2279
        %v2281 = vand.u32 %v2280, 4294901760
        %2282 = vmatpush1.msra.mxu0 %v2281
        %v2283 = vand.u32 %v1178, 4294901760
        %v2284 = vsub.f32 %v1178, %v2283
        %v2285 = vand.u32 %v2284, 4294901760
        %2286 = vmatprep.subr.mxu0 %v2285
        %v2287 = vand.u32 %v1177, 4294901760
        %v2288 = vsub.f32 %v1177, %v2287
        %v2289 = vand.u32 %v2288, 4294901760
        %2290 = vmatpush1.msra.mxu0 %v2289
        %v2291 = vand.u32 %v1180, 4294901760
        %v2292 = vsub.f32 %v1180, %v2291
        %v2293 = vand.u32 %v2292, 4294901760
        %2294 = vmatprep.subr.mxu0 %v2293
        %v2295 = vand.u32 %v1179, 4294901760
        %v2296 = vsub.f32 %v1179, %v2295
        %v2297 = vand.u32 %v2296, 4294901760
        %2298 = vmatpush1.msra.mxu0 %v2297
        %v2299 = vand.u32 %v1182, 4294901760
        %v2300 = vsub.f32 %v1182, %v2299
        %v2301 = vand.u32 %v2300, 4294901760
        %2302 = vmatprep.subr.mxu0 %v2301
        %v2303 = vand.u32 %v1181, 4294901760
        %v2304 = vsub.f32 %v1181, %v2303
        %v2305 = vand.u32 %v2304, 4294901760
        %2306 = vmatpush1.msra.mxu0 %v2305
        %v2307 = vand.u32 %v1184, 4294901760
        %v2308 = vsub.f32 %v1184, %v2307
        %v2309 = vand.u32 %v2308, 4294901760
        %2310 = vmatprep.subr.mxu0 %v2309
        %v2311 = vand.u32 %v1183, 4294901760
        %v2312 = vsub.f32 %v1183, %v2311
        %v2313 = vand.u32 %v2312, 4294901760
        %2314 = vmatpush1.msra.mxu0 %v2313
        %v2315 = vand.u32 %v1186, 4294901760
        %v2316 = vsub.f32 %v1186, %v2315
        %v2317 = vand.u32 %v2316, 4294901760
        %2318 = vmatprep.subr.mxu0 %v2317
        %v2319 = vand.u32 %v1185, 4294901760
        %v2320 = vsub.f32 %v1185, %v2319
        %v2321 = vand.u32 %v2320, 4294901760
        %2322 = vmatpush1.msra.mxu0 %v2321
        %v2323 = vand.u32 %v1188, 4294901760
        %v2324 = vsub.f32 %v1188, %v2323
        %v2325 = vand.u32 %v2324, 4294901760
        %2326 = vmatprep.subr.mxu0 %v2325
        %v2327 = vand.u32 %v1187, 4294901760
        %v2328 = vsub.f32 %v1187, %v2327
        %v2329 = vand.u32 %v2328, 4294901760
        %2330 = vmatpush1.msra.mxu0 %v2329
        %v2331 = vand.u32 %v1191, 4294901760
        %2332 = vmatprep.mubr.f32.mxu0 %v2331
        %v2333 = vand.u32 %v1189, 4294901760
        %2334 = vmatmul.mubr.f32.gmra.mrb[0].mxu0 %v2333
        %v2335 = vpop.f32.mrb[0].mxu0
        %v2336 = vadd.f32 %v2071, %v2335
        %v2337 = vpop.f32.mrb[0].mxu0
        %v2338 = vadd.f32 %v2073, %v2337
        %2339 = vdwg.mxu0
        %v2340 = vand.u32 %v1126, 4294901760
        %2341 = vmatprep.subr.mxu0 %v2340
        %v2342 = vand.u32 %v1125, 4294901760
        %2343 = vmatpush1.msra.mxu0 %v2342
        %v2344 = vand.u32 %v1128, 4294901760
        %2345 = vmatprep.subr.mxu0 %v2344
        %v2346 = vand.u32 %v1127, 4294901760
        %2347 = vmatpush1.msra.mxu0 %v2346
        %v2348 = vand.u32 %v1130, 4294901760
        %2349 = vmatprep.subr.mxu0 %v2348
        %v2350 = vand.u32 %v1129, 4294901760
        %2351 = vmatpush1.msra.mxu0 %v2350
        %v2352 = vand.u32 %v1132, 4294901760
        %2353 = vmatprep.subr.mxu0 %v2352
        %v2354 = vand.u32 %v1131, 4294901760
        %2355 = vmatpush1.msra.mxu0 %v2354
        %v2356 = vand.u32 %v1134, 4294901760
        %2357 = vmatprep.subr.mxu0 %v2356
        %v2358 = vand.u32 %v1133, 4294901760
        %2359 = vmatpush1.msra.mxu0 %v2358
        %v2360 = vand.u32 %v1136, 4294901760
        %2361 = vmatprep.subr.mxu0 %v2360
        %v2362 = vand.u32 %v1135, 4294901760
        %2363 = vmatpush1.msra.mxu0 %v2362
        %v2364 = vand.u32 %v1138, 4294901760
        %2365 = vmatprep.subr.mxu0 %v2364
        %v2366 = vand.u32 %v1137, 4294901760
        %2367 = vmatpush1.msra.mxu0 %v2366
        %v2368 = vand.u32 %v1140, 4294901760
        %2369 = vmatprep.subr.mxu0 %v2368
        %v2370 = vand.u32 %v1139, 4294901760
        %2371 = vmatpush1.msra.mxu0 %v2370
        %v2372 = vand.u32 %v1142, 4294901760
        %2373 = vmatprep.subr.mxu0 %v2372
        %v2374 = vand.u32 %v1141, 4294901760
        %2375 = vmatpush1.msra.mxu0 %v2374
        %v2376 = vand.u32 %v1144, 4294901760
        %2377 = vmatprep.subr.mxu0 %v2376
        %v2378 = vand.u32 %v1143, 4294901760
        %2379 = vmatpush1.msra.mxu0 %v2378
        %v2380 = vand.u32 %v1146, 4294901760
        %2381 = vmatprep.subr.mxu0 %v2380
        %v2382 = vand.u32 %v1145, 4294901760
        %2383 = vmatpush1.msra.mxu0 %v2382
        %v2384 = vand.u32 %v1148, 4294901760
        %2385 = vmatprep.subr.mxu0 %v2384
        %v2386 = vand.u32 %v1147, 4294901760
        %2387 = vmatpush1.msra.mxu0 %v2386
        %v2388 = vand.u32 %v1150, 4294901760
        %2389 = vmatprep.subr.mxu0 %v2388
        %v2390 = vand.u32 %v1149, 4294901760
        %2391 = vmatpush1.msra.mxu0 %v2390
        %v2392 = vand.u32 %v1152, 4294901760
        %2393 = vmatprep.subr.mxu0 %v2392
        %v2394 = vand.u32 %v1151, 4294901760
        %2395 = vmatpush1.msra.mxu0 %v2394
        %v2396 = vand.u32 %v1154, 4294901760
        %2397 = vmatprep.subr.mxu0 %v2396
        %v2398 = vand.u32 %v1153, 4294901760
        %2399 = vmatpush1.msra.mxu0 %v2398
        %v2400 = vand.u32 %v1156, 4294901760
        %2401 = vmatprep.subr.mxu0 %v2400
        %v2402 = vand.u32 %v1155, 4294901760
        %2403 = vmatpush1.msra.mxu0 %v2402
        %v2404 = vand.u32 %v1158, 4294901760
        %2405 = vmatprep.subr.mxu0 %v2404
        %v2406 = vand.u32 %v1157, 4294901760
        %2407 = vmatpush1.msra.mxu0 %v2406
        %v2408 = vand.u32 %v1160, 4294901760
        %2409 = vmatprep.subr.mxu0 %v2408
        %v2410 = vand.u32 %v1159, 4294901760
        %2411 = vmatpush1.msra.mxu0 %v2410
        %v2412 = vand.u32 %v1162, 4294901760
        %2413 = vmatprep.subr.mxu0 %v2412
        %v2414 = vand.u32 %v1161, 4294901760
        %2415 = vmatpush1.msra.mxu0 %v2414
        %v2416 = vand.u32 %v1164, 4294901760
        %2417 = vmatprep.subr.mxu0 %v2416
        %v2418 = vand.u32 %v1163, 4294901760
        %2419 = vmatpush1.msra.mxu0 %v2418
        %v2420 = vand.u32 %v1166, 4294901760
        %2421 = vmatprep.subr.mxu0 %v2420
        %v2422 = vand.u32 %v1165, 4294901760
        %2423 = vmatpush1.msra.mxu0 %v2422
        %v2424 = vand.u32 %v1168, 4294901760
        %2425 = vmatprep.subr.mxu0 %v2424
        %v2426 = vand.u32 %v1167, 4294901760
        %2427 = vmatpush1.msra.mxu0 %v2426
        %v2428 = vand.u32 %v1170, 4294901760
        %2429 = vmatprep.subr.mxu0 %v2428
        %v2430 = vand.u32 %v1169, 4294901760
        %2431 = vmatpush1.msra.mxu0 %v2430
        %v2432 = vand.u32 %v1172, 4294901760
        %2433 = vmatprep.subr.mxu0 %v2432
        %v2434 = vand.u32 %v1171, 4294901760
        %2435 = vmatpush1.msra.mxu0 %v2434
        %v2436 = vand.u32 %v1174, 4294901760
        %2437 = vmatprep.subr.mxu0 %v2436
        %v2438 = vand.u32 %v1173, 4294901760
        %2439 = vmatpush1.msra.mxu0 %v2438
        %v2440 = vand.u32 %v1176, 4294901760
        %2441 = vmatprep.subr.mxu0 %v2440
        %v2442 = vand.u32 %v1175, 4294901760
        %2443 = vmatpush1.msra.mxu0 %v2442
        %v2444 = vand.u32 %v1178, 4294901760
        %2445 = vmatprep.subr.mxu0 %v2444
        %v2446 = vand.u32 %v1177, 4294901760
        %2447 = vmatpush1.msra.mxu0 %v2446
        %v2448 = vand.u32 %v1180, 4294901760
        %2449 = vmatprep.subr.mxu0 %v2448
        %v2450 = vand.u32 %v1179, 4294901760
        %2451 = vmatpush1.msra.mxu0 %v2450
        %v2452 = vand.u32 %v1182, 4294901760
        %2453 = vmatprep.subr.mxu0 %v2452
        %v2454 = vand.u32 %v1181, 4294901760
        %2455 = vmatpush1.msra.mxu0 %v2454
        %v2456 = vand.u32 %v1184, 4294901760
        %2457 = vmatprep.subr.mxu0 %v2456
        %v2458 = vand.u32 %v1183, 4294901760
        %2459 = vmatpush1.msra.mxu0 %v2458
        %v2460 = vand.u32 %v1186, 4294901760
        %2461 = vmatprep.subr.mxu0 %v2460
        %v2462 = vand.u32 %v1185, 4294901760
        %2463 = vmatpush1.msra.mxu0 %v2462
        %v2464 = vand.u32 %v1188, 4294901760
        %2465 = vmatprep.subr.mxu0 %v2464
        %v2466 = vand.u32 %v1187, 4294901760
        %2467 = vmatpush1.msra.mxu0 %v2466
        %v2468 = vand.u32 %v1191, 4294901760
        %2469 = vmatprep.mubr.f32.mxu0 %v2468
        %v2470 = vand.u32 %v1189, 4294901760
        %2471 = vmatmul.mubr.f32.gmra.mrb[0].mxu0 %v2470
        %v2472 = vpop.f32.mrb[0].mxu0
        %v2473 = vadd.f32 %v2336, %v2472
        %v2474 = vpop.f32.mrb[0].mxu0
        %v2475 = vadd.f32 %v2338, %v2474
        %2476 = vdwg.mxu0
        %v2477 = vld [vmem:[%s259] sm:$0x77]
        %v2478 = vld [vmem:[#allocation2] sm:$0x77]
        %v2481 = vcombine.low %v2473, %v2475
        %v2483 = vsub.f32 %v2477, %v2481
        %v2484 = vand.u32 2147483647, %v2483
        %v2485 = vadd.f32 %v2478, %v2484
        %2486 = vst [vmem:[#allocation2] sm:$0x77] %v2485
        %v2487 = vld [vmem:[%s269] sm:$0xff]
        %v2488 = vld [vmem:[%s269 + $0x8] sm:$0xff]
        %v2489 = vld [vmem:[%s269 + $0x10] sm:$0xff]
        %v2490 = vld [vmem:[%s269 + $0x18] sm:$0xff]
        %v2491 = vld [vmem:[#allocation3] sm:$0xff]
        %v2492 = vld [vmem:[#allocation3 + $0x8] sm:$0xff]
        %v2493 = vld [vmem:[#allocation3 + $0x10] sm:$0xff]
        %v2494 = vld [vmem:[#allocation3 + $0x18] sm:$0xff]
        %2499 = vrot.lane.b32.xlu0 %v2487, 1
        %v2500 = vpop.permute.xlu0 %2499
        %2501 = vrot.lane.b32.xlu0 %v2488, 1
        %v2502 = vpop.permute.xlu0 %2501
        %2503 = vrot.lane.b32.xlu0 %v2489, 1
        %v2504 = vpop.permute.xlu0 %2503
        %2505 = vrot.lane.b32.xlu0 %v2490, 1
        %v2506 = vpop.permute.xlu0 %2505
        %v2511 = vsub.f32 %v2487, %v2500
        %v2512 = vsub.f32 %v2488, %v2502
        %v2513 = vsub.f32 %v2489, %v2504
        %v2514 = vsub.f32 %v2490, %v2506
        %v2515 = vand.u32 2147483647, %v2511
        %v2516 = vand.u32 2147483647, %v2512
        %v2517 = vand.u32 2147483647, %v2513
        %v2518 = vand.u32 2147483647, %v2514
        %2523 = vrot.lane.b32.xlu0 %v2515, 127
        %v2524 = vpop.permute.xlu0 %2523
        %2525 = vrot.lane.b32.xlu0 %v2516, 127
        %v2526 = vpop.permute.xlu0 %2525
        %2527 = vrot.lane.b32.xlu0 %v2517, 127
        %v2528 = vpop.permute.xlu0 %2527
        %2529 = vrot.lane.b32.xlu0 %v2518, 127
        %v2530 = vpop.permute.xlu0 %2529
        %v2535 = vadd.f32 %v2491, %v2524
        %v2536 = vadd.f32 %v2492, %v2526
        %v2537 = vadd.f32 %v2493, %v2528
        %v2538 = vadd.f32 %v2494, %v2530
        %vm2539 = vcmask 121856
        %2540 = vst.msk [vmem:[#allocation3] sm:$0xff] %vm2539, %v2535
        %2541 = vst.msk [vmem:[#allocation3 + $0x8] sm:$0xff] %vm2539, %v2536
        %2542 = vst.msk [vmem:[#allocation3 + $0x10] sm:$0xff] %vm2539, %v2537
        %2543 = vst.msk [vmem:[#allocation3 + $0x18] sm:$0xff] %vm2539, %v2538
        %v2544 = vld [vmem:[#allocation4] sm:$0xff]
        %v2545 = vld [vmem:[#allocation4 + $0x8] sm:$0x7f]
        %v2546 = vld [vmem:[#allocation4 + $0x10] sm:$0xff]
        %v2547 = vld [vmem:[#allocation4 + $0x18] sm:$0x7f]
        %vm2548 = vcmask 1040384
        %v2549 = vrot.slane %v2487, 7
        %v2550 = vrot.slane %v2488, 7
        %v2551 = vsel %vm2548, %v2549, %v2550
        %v2552 = vrot.slane %v2489, 7
        %v2553 = vrot.slane %v2490, 7
        %v2554 = vsel %vm2548, %v2552, %v2553
        %v2559 = vsub.f32 %v2487, %v2549
        %v2560 = vsub.f32 %v2488, %v2551
        %v2561 = vsub.f32 %v2489, %v2552
        %v2562 = vsub.f32 %v2490, %v2554
        %v2563 = vand.u32 2147483647, %v2559
        %v2564 = vand.u32 2147483647, %v2560
        %v2565 = vand.u32 2147483647, %v2561
        %v2566 = vand.u32 2147483647, %v2562
        %vm2571 = vcmask 1046528
        %v2572 = vrot.slane %v2563, 1
        %v2573 = vrot.slane %v2564, 1
        %v2574 = vsel %vm2571, %v2572, %v2573
        %v2575 = vrot.slane %v2565, 1
        %v2576 = vrot.slane %v2566, 1
        %v2577 = vsel %vm2571, %v2575, %v2576
        %v2582 = vadd.f32 %v2544, %v2574
        %v2583 = vadd.f32 %v2545, %v2573
        %v2584 = vadd.f32 %v2546, %v2577
        %v2585 = vadd.f32 %v2547, %v2576
        %vm2586 = vcmask 130048
        %2587 = vst.msk [vmem:[#allocation4] sm:$0xff] %vm2586, %v2582
        %vm2588 = vcmask 129024
        %2589 = vst.msk [vmem:[#allocation4 + $0x8] sm:$0x7f] %vm2588, %v2583
        %2590 = vst.msk [vmem:[#allocation4 + $0x10] sm:$0xff] %vm2586, %v2584
        %2591 = vst.msk [vmem:[#allocation4 + $0x18] sm:$0x7f] %vm2588, %v2585
        %p2592 = scmp.eq.s32.totalorder %s19, 1
        // Predicated region
        $region41: #{ofr_loss.1} parent=35 // pred_check
          %p2593 = pneg %p2592
        $region42: #{ofr_loss.1} parent=35 // pred_check_branch
          %2595 = sbr.rel (%p2593) target = $region44
        $region43: #{ofr_loss.1} parent=35 // pred_region
          %v2596 = vld [vmem:[#allocation2] sm:$0x77]
          %v2598 = vcombine.high %v2596, %v2596
          %vm2600 = vcmask 1042432
          %v2601 = vsel %vm2600, %v2596, 0.0
          %v2602 = vsel %vm2600, %v2598, 0.0
          %v2603 = vadd.f32 %v2601, %v2602
          %2604 = vadd.xlane.f32.xlu0 %v2603
          %v2605 = vpop.xlane.xlu0 %2604
          %v2606 = vrot.slane %v2605, 4
          %v2607 = vadd.f32 %v2605, %v2606
          %v2608 = vrot.slane %v2607, 2
          %v2609 = vadd.f32 %v2607, %v2608
          %v2610 = vrot.slane %v2609, 1
          %v2611 = vadd.f32 %v2609, %v2610
          %s2612 = vtos %v2611
          %s2613 = scalar_lea.smem [#allocation5], 0
          %2614 = sst [smem:[%s2613]] %s2612
          %v2615 = vld [vmem:[#allocation3] sm:$0xff]
          %v2616 = vld [vmem:[#allocation3 + $0x8] sm:$0xff]
          %v2617 = vld [vmem:[#allocation3 + $0x10] sm:$0xff]
          %v2618 = vld [vmem:[#allocation3 + $0x18] sm:$0xff]
          %v2619 = vsel %vm2539, %v2615, 0.0
          %v2620 = vsel %vm2539, %v2616, 0.0
          %v2621 = vadd.f32 %v2619, %v2620
          %v2622 = vsel %vm2539, %v2617, 0.0
          %v2623 = vadd.f32 %v2621, %v2622
          %v2624 = vsel %vm2539, %v2618, 0.0
          %v2625 = vadd.f32 %v2623, %v2624
          %2626 = vadd.xlane.f32.xlu0 %v2625
          %v2627 = vpop.xlane.xlu0 %2626
          %v2628 = vrot.slane %v2627, 4
          %v2629 = vadd.f32 %v2627, %v2628
          %v2630 = vrot.slane %v2629, 2
          %v2631 = vadd.f32 %v2629, %v2630
          %v2632 = vrot.slane %v2631, 1
          %v2633 = vadd.f32 %v2631, %v2632
          %s2634 = vtos %v2633
          %v2635 = vld [vmem:[#allocation4] sm:$0xff]
          %v2636 = vld [vmem:[#allocation4 + $0x8] sm:$0x7f]
          %v2637 = vld [vmem:[#allocation4 + $0x10] sm:$0xff]
          %v2638 = vld [vmem:[#allocation4 + $0x18] sm:$0x7f]
          %v2639 = vsel %vm2586, %v2635, 0.0
          %v2640 = vsel %vm2588, %v2636, 0.0
          %v2641 = vadd.f32 %v2639, %v2640
          %v2642 = vsel %vm2586, %v2637, 0.0
          %v2643 = vadd.f32 %v2641, %v2642
          %v2644 = vsel %vm2588, %v2638, 0.0
          %v2645 = vadd.f32 %v2643, %v2644
          %2646 = vadd.xlane.f32.xlu0 %v2645
          %v2647 = vpop.xlane.xlu0 %2646
          %v2648 = vrot.slane %v2647, 4
          %v2649 = vadd.f32 %v2647, %v2648
          %v2650 = vrot.slane %v2649, 2
          %v2651 = vadd.f32 %v2649, %v2650
          %v2652 = vrot.slane %v2651, 1
          %v2653 = vadd.f32 %v2651, %v2652
          %s2654 = vtos %v2653
          %s2655 = sadd.f32 %s2634, %s2654
          %s2656 = scalar_lea.smem [#allocation7], 0
          %2657 = sst [smem:[%s2656]] %s2655
        $region44: #{ofr_loss.1} parent=35 // pred_fallthru
          _
        // Predicated region
        $region45: #{ofr_loss.1} parent=35 // pred_check
          %p2658 = pneg %p136
        $region46: #{ofr_loss.1} parent=35 // pred_check_branch
          %2660 = sbr.rel (%p2658) target = $region48
        $region47: #{ofr_loss.1} parent=35 // pred_region
          %s2662 = ssub.s32 16, 16
          %2663 = vsyncadd [#allocation6], %s2662
          %2666 = dma.smem_to_hbm [#allocation5], 16, %s4, [#allocation6]
        $region48: #{ofr_loss.1} parent=35 // pred_fallthru
          _
        // Predicated region
        $region49: #{ofr_loss.1} parent=35 // pred_check
          %p2667 = pneg %p157
        $region50: #{ofr_loss.1} parent=35 // pred_check_branch
          %2669 = sbr.rel (%p2667) target = $region52
        $region51: #{ofr_loss.1} parent=35 // pred_region
          %s2671 = ssub.s32 16, 16
          %2672 = vsyncadd [#allocation8], %s2671
          %2675 = dma.smem_to_hbm [#allocation7], 16, %s5, [#allocation8]
        $region52: #{ofr_loss.1} parent=35 // pred_fallthru
          _
        // Predicated region
        $region53: #{ofr_loss.1} parent=35 // pred_check
          %p2676 = pneg %p136
        $region54: #{ofr_loss.1} parent=35 // pred_check_branch
          %2678 = sbr.rel (%p2676) target = $region56
        $region55: #{ofr_loss.1} parent=35 // pred_region
          %2679 = dma.done [#allocation6], 16
        $region56: #{ofr_loss.1} parent=35 // pred_fallthru
          _
        // Predicated region
        $region57: #{ofr_loss.1} parent=35 // pred_check
          %p2680 = pneg %p157
        $region58: #{ofr_loss.1} parent=35 // pred_check_branch
          %2682 = sbr.rel (%p2680) target = $region60
        $region59: #{ofr_loss.1} parent=35 // pred_region
          %2683 = dma.done [#allocation8], 16
        $region60: #{ofr_loss.1} parent=35 // pred_fallthru
          _
        %2684 = sfence
      $region36: #{ofr_loss.1} parent=5 // pred_fallthru
        _
      %p2685 = scmp.le.s32.totalorder 2, %s14
      // Predicated region
      $region61: #{ofr_loss.1} parent=5 // pred_check
        %p2686 = pneg %p2685
      $region62: #{ofr_loss.1} parent=5 // pred_check_branch
        %2688 = sbr.rel (%p2686) target = $region64
      $region63: #{ofr_loss.1} parent=5 // pred_region
        %s2689 = ssub.s32 %s14, 2
      $region64: #{ofr_loss.1} parent=5 // pred_fallthru
        _
    $region6: #{ofr_loss.1} parent=1 // loop_footer
      %s18 = sadd.s32 1, %s14
    $region7: #{ofr_loss.1} parent=1 // loop_footer_branch
      %13 = sbr.rel target = $region3
    $region8: #{ofr_loss.1} parent=1 // loop_exit
      _
    %2690 = vsyncpa [#allocation6], 1
    %s2691 = scalar_lea.sflag [#allocation6], 1
    %2692 = vsyncpa %s2691, 1
    %2693 = vsyncpa [#allocation8], 1

</llo_original>
